<compile_context>
chip_gen: v6e
topology: v6e:2x2x1
jax: 0.10.0
libtpu: 0.0.40
codegen_flags: <defaults>
</compile_context>

<pallas_src>
import jax
import jax.numpy as jnp
import numpy as np
from jax import lax
from jax.experimental import pallas as pl
from jax.experimental.pallas import tpu as pltpu

# ---------------------------------------------------------------------------
# Model hyper-parameters (fixed by the PyTorch module / chosen small shapes)
# ---------------------------------------------------------------------------
HIDDEN_DIM = 64          # self._hidden_dim
INPUT_DIM = 2            # self._input_dim
OUTPUT_DIM = 2           # self._output_dim
LOOKBACK_WINDOW = 8      # seq length T
PREDICTION_HORIZON = 4   # H
OUT_DIM = OUTPUT_DIM * PREDICTION_HORIZON   # 8
OUT_PAD = 128            # lane-dense output slab (unmasked vst)
BATCH = 2                # B


# ---------------------------------------------------------------------------
# Pallas kernel: LSTM recurrence + final Linear (everything stays in vregs)
# ---------------------------------------------------------------------------
def _lstm_fc_kernel(x_ref,        # (B, T, INPUT_DIM)  f32
                    w_ih_ref,     # (INPUT_DIM, 4*H)   f32, gate order [i,f,o,g]
                    w_hh_ref,     # (H, 4*H)           bf16
                    b_ref,        # (1, 4*H)           f32, b_ih + b_hh
                    fc_w_hbm,     # (H, OUT_PAD)       bf16, left in HBM (pl.ANY)
                    fc_b_hbm,     # (1, OUT_PAD)       f32,  left in HBM (pl.ANY)
                    out_ref,      # (B, OUT_PAD)       f32
                    fc_w_vmem,    # scratch (H, OUT_PAD) bf16
                    fc_b_vmem,    # scratch (1, OUT_PAD) f32
                    dma_sems):    # scratch DMA semaphores (2,)
    B, T, _ = x_ref.shape
    H = w_hh_ref.shape[0]          # 64 (natural hidden width, no padding)

    # FC weights are only needed after the 8-step recurrence: issue their DMA
    # now so it overlaps the serial MXU chain, wait just before the final dot.
    fc_w_cp = pltpu.make_async_copy(fc_w_hbm, fc_w_vmem, dma_sems.at[0])
    fc_b_cp = pltpu.make_async_copy(fc_b_hbm, fc_b_vmem, dma_sems.at[1])
    fc_w_cp.start()
    fc_b_cp.start()

    x = x_ref[...]                                  # (B, T, 2)
    w_ih_r0 = w_ih_ref[0:1, :]                      # (1, 4H)
    w_ih_r1 = w_ih_ref[1:2, :]                      # (1, 4H)
    bias = b_ref[...]                               # (1, 4H)
    w_hh = w_hh_ref[...]                            # (H, 4H) bf16

    h = jnp.zeros((B, H), jnp.float32)
    c = jnp.zeros((B, H), jnp.float32)

    # Fully-unrolled recurrence (T static & tiny).  Gate layout [i, f, o, g]
    # at the natural 64-lane stride: one sigmoid covers i|f|o, one tanh covers g.
    for t in range(T):
        x_t = x[:, t, :]                            # (B, 2)
        # K=2 input projection on the VPU (two broadcast-FMAs), not the MXU.
        xp = x_t[:, 0:1] * w_ih_r0 + x_t[:, 1:2] * w_ih_r1 + bias   # (B, 4H) f32
        if t == 0:
            gates = xp                              # h == 0: skip the matmul
        else:
            gates = xp + jnp.dot(h.astype(jnp.bfloat16), w_hh,
                                 preferred_element_type=jnp.float32)
        ifo = jax.nn.sigmoid(gates[:, :3 * H])
        g_g = jnp.tanh(gates[:, 3 * H:])
        i_g = ifo[:, 0 * H:1 * H]
        f_g = ifo[:, 1 * H:2 * H]
        o_g = ifo[:, 2 * H:3 * H]
        c = f_g * c + i_g * g_g
        h = o_g * jnp.tanh(c)

    # Final FC on the last hidden state (== fc(lstm(x)[0][:, -1, :]) in torch),
    # written to a lane-dense 128-wide slab (unmasked vst); wrapper slices.
    fc_w_cp.wait()
    fc_b_cp.wait()
    out_ref[...] = (jnp.dot(h.astype(jnp.bfloat16), fc_w_vmem[...],
                            preferred_element_type=jnp.float32)
                    + fc_b_vmem[...])


def lstm_fc_forward(x_btd, packed):
    """x_btd: (B, T, INPUT_DIM) f32 -> (B, OUT_DIM) f32."""
    B = x_btd.shape[0]
    vmem = pl.BlockSpec(memory_space=pltpu.MemorySpace.VMEM)
    hbm = pl.BlockSpec(memory_space=pl.ANY)
    out_pad = pl.pallas_call(
        _lstm_fc_kernel,
        out_shape=jax.ShapeDtypeStruct((B, OUT_PAD), jnp.float32),
        in_specs=[vmem, vmem, vmem, vmem, hbm, hbm],
        out_specs=vmem,
        scratch_shapes=[
            pltpu.VMEM((HIDDEN_DIM, OUT_PAD), jnp.bfloat16),   # fc_w landing buffer
            pltpu.VMEM((1, OUT_PAD), jnp.float32),             # fc_b landing buffer
            pltpu.SemaphoreType.DMA((2,)),
        ],
    )(x_btd,
      packed["w_ih"], packed["w_hh"], packed["b"],
      packed["fc_w"], packed["fc_b"])
    return out_pad[:, :OUT_DIM]


# ---------------------------------------------------------------------------
# Parameters: logical (torch-like) layout + packing into the kernel layout
# ---------------------------------------------------------------------------
def init_logical_params(key):
    """torch.nn.LSTM / nn.Linear shaped params, pre-transposed, gate order [i,f,g,o]."""
    k1, k2, k3, k4, k5, k6 = jax.random.split(key, 6)
    s = 1.0 / jnp.sqrt(jnp.float32(HIDDEN_DIM))
    w_ih = jax.random.uniform(k1, (INPUT_DIM, 4 * HIDDEN_DIM), jnp.float32, -s, s)
    w_hh = jax.random.uniform(k2, (HIDDEN_DIM, 4 * HIDDEN_DIM), jnp.float32, -s, s)
    b_ih = jax.random.uniform(k3, (1, 4 * HIDDEN_DIM), jnp.float32, -s, s)
    b_hh = jax.random.uniform(k4, (1, 4 * HIDDEN_DIM), jnp.float32, -s, s)
    fc_w = jax.random.uniform(k5, (HIDDEN_DIM, OUT_DIM), jnp.float32, -s, s)
    fc_b = jax.random.uniform(k6, (1, OUT_DIM), jnp.float32, -s, s)
    return {"w_ih": w_ih, "w_hh": w_hh, "b": b_ih + b_hh,
            "fc_w": fc_w, "fc_b": fc_b}


def pack_params(logical):
    """Reorder gates [i,f,g,o] -> [i,f,o,g] at the natural 64-lane stride.
    MXU-facing weights (w_hh, fc_w) are stored in bf16; accumulation stays f32."""
    H = HIDDEN_DIM

    def split_gates(w):
        return [w[..., k * H:(k + 1) * H] for k in range(4)]

    def reorder(w):
        i, f, g, o = split_gates(w)
        return jnp.concatenate([i, f, o, g], axis=1)

    w_ih = reorder(logical["w_ih"]).astype(jnp.float32)            # (2, 256)
    w_hh = reorder(logical["w_hh"]).astype(jnp.bfloat16)           # (64, 256) bf16
    b = reorder(logical["b"]).astype(jnp.float32)                  # (1, 256)
    fc_w = jnp.pad(logical["fc_w"],
                   ((0, 0), (0, OUT_PAD - OUT_DIM))).astype(jnp.bfloat16)   # (64, 128)
    fc_b = jnp.pad(logical["fc_b"],
                   ((0, 0), (0, OUT_PAD - OUT_DIM))).astype(jnp.float32)    # (1, 128)
    return {"w_ih": w_ih, "w_hh": w_hh, "b": b, "fc_w": fc_w, "fc_b": fc_b}


# ---------------------------------------------------------------------------
# Pure-JAX reference (torch.nn.LSTM semantics, f32) for a correctness check
# ---------------------------------------------------------------------------
def lstm_fc_reference(x_btd, logical):
    hp = lax.Precision.HIGHEST
    B, T, _ = x_btd.shape
    h = jnp.zeros((B, HIDDEN_DIM), jnp.float32)
    c = jnp.zeros((B, HIDDEN_DIM), jnp.float32)
    Hd = HIDDEN_DIM
    for t in range(T):
        gates = (jnp.dot(x_btd[:, t, :], logical["w_ih"], precision=hp)
                 + jnp.dot(h, logical["w_hh"], precision=hp) + logical["b"])
        i = jax.nn.sigmoid(gates[:, 0 * Hd:1 * Hd])
        f = jax.nn.sigmoid(gates[:, 1 * Hd:2 * Hd])
        g = jnp.tanh(gates[:, 2 * Hd:3 * Hd])
        o = jax.nn.sigmoid(gates[:, 3 * Hd:4 * Hd])
        c = f * c + i * g
        h = o * jnp.tanh(c)
    return jnp.dot(h, logical["fc_w"], precision=hp) + logical["fc_b"]


# ---------------------------------------------------------------------------
# Glue matching Controller.forward semantics (float32 on TPU)
# ---------------------------------------------------------------------------
# TODO(synk): deterministic MinMaxScaler stand-in (feature order [pv, load]);
# the real module carries a fitted sklearn scaler.
SCALER_DATA_MIN = jnp.array([0.0, 0.0], dtype=jnp.float32)
SCALER_DATA_MAX = jnp.array([5.0, 10.0], dtype=jnp.float32)


def denormalize(predictions):
    """MinMaxScaler.inverse_transform: x * (data_max - data_min) + data_min."""
    denorm = predictions * (SCALER_DATA_MAX - SCALER_DATA_MIN) + SCALER_DATA_MIN
    return denorm[:, :, 0], denorm[:, :, 1]          # pv_hat, load_hat


def surrogate_optimization_layer(price_tariff, load_hat, pv_hat, initial_state):
    # TODO(synk): the real optimization_layer is an external differentiable convex
    # program (cvxpylayers-style); no Pallas equivalent — greedy battery-dispatch
    # surrogate with matching output shapes.
    del price_tariff
    net = pv_hat - load_hat                           # (B, H)
    Ps_in = jnp.maximum(net, 0.0)
    Ps_out = jnp.maximum(-net, 0.0)
    Pl = load_hat
    Pr = pv_hat
    eps = jnp.zeros_like(pv_hat)
    sample_time, efficiency = 0.25, 0.95
    delta = sample_time * (efficiency * Ps_in - Ps_out / efficiency)
    s = initial_state + jnp.cumsum(delta, axis=1)
    return Ps_in, Ps_out, Pl, Pr, eps, s


def compute_Pg(Ps_in, Ps_out, Pr, Pl):
    return Pr - Ps_in + Ps_out - Pl


@jax.jit
def controller_forward(inputs, initial_state, packed):
    """Mirror of Controller.forward.
    NOTE: torch promotes predictions / initial_state to float64; TPU has no native
    f64 (software-emulated), so the glue runs in float32 (documented deviation)."""
    inputs = inputs.astype(jnp.float32)
    initial_state = initial_state.astype(jnp.float32)

    # LSTM + FC hot path (Pallas kernel) == fc(lstm(inputs)[0][:, -1, :]).
    fc_out = lstm_fc_forward(inputs, packed)                       # (B, 8)
    predictions = fc_out.reshape(fc_out.shape[0],
                                 PREDICTION_HORIZON, OUTPUT_DIM)   # (B, 4, 2)

    pv_hat, load_hat = denormalize(predictions)
    price_tariff = jnp.full_like(pv_hat, 40.0)

    Ps_in, Ps_out, Pl, Pr, eps, s = surrogate_optimization_layer(
        price_tariff, load_hat, pv_hat, initial_state)
    Pg_hat = compute_Pg(Ps_in, Ps_out, Pr, Pl)
    return predictions, (Ps_in, Ps_out, Pl, Pr, eps, s), Pg_hat


# ---------------------------------------------------------------------------
if __name__ == "__main__":
    key = jax.random.PRNGKey(0)
    k_params, k_x, k_s = jax.random.split(key, 3)

    logical = init_logical_params(k_params)
    packed = pack_params(logical)

    # inputs: (batch, lookback_window, input_dim) — normalized [pv, load] history.
    inputs = jax.random.uniform(k_x, (BATCH, LOOKBACK_WINDOW, INPUT_DIM),
                                dtype=jnp.float32)
    # initial storage state: (batch, 1)
    initial_state = jax.random.uniform(k_s, (BATCH, 1), dtype=jnp.float32) * 10.0

    predictions, opt_out, Pg_hat = controller_forward(inputs, initial_state, packed)
    jax.block_until_ready((predictions, opt_out, Pg_hat))

    # Correctness check of the Pallas LSTM+FC against a plain-JAX f32 reference.
    # Tolerance relaxed to 1e-2 because the kernel feeds the MXU bf16 operands
    # (f32 accumulation); the 8-step recurrence compounds ~1e-3-level rounding.
    ref_pred = lstm_fc_reference(inputs, logical).reshape(
        BATCH, PREDICTION_HORIZON, OUTPUT_DIM)
    np.testing.assert_allclose(np.asarray(predictions), np.asarray(ref_pred),
                               rtol=1e-2, atol=1e-2)

    assert predictions.shape == (BATCH, PREDICTION_HORIZON, OUTPUT_DIM)
    assert predictions.dtype == jnp.float32
    assert Pg_hat.shape == (BATCH, PREDICTION_HORIZON)
    print("KERNEL_OK")
</pallas_src>

<mosaic_0001>
module attributes {stable_mosaic.version = 11 : i64} {
  func.func @_lstm_fc_kernel(%arg0: memref<2x8x2xf32, #tpu.memory_space<vmem>>, %arg1: memref<2x256xf32, #tpu.memory_space<vmem>>, %arg2: memref<64x256xbf16, #tpu.memory_space<vmem>>, %arg3: memref<1x256xf32, #tpu.memory_space<vmem>>, %arg4: memref<64x128xbf16, #tpu.memory_space<any>>, %arg5: memref<1x128xf32, #tpu.memory_space<any>>, %arg6: memref<2x128xf32, #tpu.memory_space<vmem>>, %arg7: memref<64x128xbf16, #tpu.memory_space<vmem>>, %arg8: memref<1x128xf32, #tpu.memory_space<vmem>>, %arg9: memref<2x!tpu.dma_semaphore, #tpu.memory_space<semaphore_mem>>) attributes {dimension_semantics = [], scalar_prefetch = 0 : i64, scratch_operands = 3 : i64, tpu.core_type = #tpu.core_type<tc>} {
    %c0_i32 = arith.constant 0 : i32
    %0 = tpu.memref_slice %arg9[%c0_i32] : memref<2x!tpu.dma_semaphore, #tpu.memory_space<semaphore_mem>> -> memref<1x!tpu.dma_semaphore, #tpu.memory_space<semaphore_mem>>
    %1 = tpu.memref_squeeze %0 : memref<1x!tpu.dma_semaphore, #tpu.memory_space<semaphore_mem>> -> memref<!tpu.dma_semaphore, #tpu.memory_space<semaphore_mem>>
    tpu.enqueue_dma source(%arg4 : memref<64x128xbf16, #tpu.memory_space<any>>) target(%arg7 : memref<64x128xbf16, #tpu.memory_space<vmem>>) target_semaphore(%1 : memref<!tpu.dma_semaphore, #tpu.memory_space<semaphore_mem>>)
    %c1_i32 = arith.constant 1 : i32
    %2 = tpu.memref_slice %arg9[%c1_i32] : memref<2x!tpu.dma_semaphore, #tpu.memory_space<semaphore_mem>> -> memref<1x!tpu.dma_semaphore, #tpu.memory_space<semaphore_mem>>
    %3 = tpu.memref_squeeze %2 : memref<1x!tpu.dma_semaphore, #tpu.memory_space<semaphore_mem>> -> memref<!tpu.dma_semaphore, #tpu.memory_space<semaphore_mem>>
    tpu.enqueue_dma source(%arg5 : memref<1x128xf32, #tpu.memory_space<any>>) target(%arg8 : memref<1x128xf32, #tpu.memory_space<vmem>>) target_semaphore(%3 : memref<!tpu.dma_semaphore, #tpu.memory_space<semaphore_mem>>)
    %c0 = arith.constant 0 : index
    %c0_0 = arith.constant 0 : index
    %c0_1 = arith.constant 0 : index
    %4 = vector.load %arg0[%c0, %c0_0, %c0_1] : memref<2x8x2xf32, #tpu.memory_space<vmem>>, vector<2x8x2xf32>
    %c0_2 = arith.constant 0 : index
    %c0_3 = arith.constant 0 : index
    %5 = vector.load %arg1[%c0_2, %c0_3] : memref<2x256xf32, #tpu.memory_space<vmem>>, vector<1x256xf32>
    %c1 = arith.constant 1 : index
    %c0_4 = arith.constant 0 : index
    %6 = vector.load %arg1[%c1, %c0_4] : memref<2x256xf32, #tpu.memory_space<vmem>>, vector<1x256xf32>
    %c0_5 = arith.constant 0 : index
    %c0_6 = arith.constant 0 : index
    %7 = vector.load %arg3[%c0_5, %c0_6] : memref<1x256xf32, #tpu.memory_space<vmem>>, vector<1x256xf32>
    %c0_7 = arith.constant 0 : index
    %c0_8 = arith.constant 0 : index
    %8 = vector.load %arg2[%c0_7, %c0_8] : memref<64x256xbf16, #tpu.memory_space<vmem>>, vector<64x256xbf16>
    %cst = arith.constant 0.000000e+00 : f32
    %9 = vector.broadcast %cst : f32 to vector<2x64xf32>
    %10 = vector.extract_strided_slice %4 {offsets = [0, 0, 0], sizes = [2, 1, 2], strides = [1, 1, 1]} : vector<2x8x2xf32> to vector<2x1x2xf32>
    %11 = vector.shape_cast %10 : vector<2x1x2xf32> to vector<2x2xf32>
    %12 = vector.extract_strided_slice %11 {offsets = [0, 0], sizes = [2, 1], strides = [1, 1]} : vector<2x2xf32> to vector<2x1xf32>
    %13 = vector.broadcast %12 : vector<2x1xf32> to vector<2x256xf32>
    %14 = vector.broadcast %5 : vector<1x256xf32> to vector<2x256xf32>
    %15 = arith.mulf %13, %14 : vector<2x256xf32>
    %16 = vector.extract_strided_slice %11 {offsets = [0, 1], sizes = [2, 1], strides = [1, 1]} : vector<2x2xf32> to vector<2x1xf32>
    %17 = vector.broadcast %16 : vector<2x1xf32> to vector<2x256xf32>
    %18 = vector.broadcast %6 : vector<1x256xf32> to vector<2x256xf32>
    %19 = arith.mulf %17, %18 : vector<2x256xf32>
    %20 = arith.addf %15, %19 : vector<2x256xf32>
    %21 = vector.broadcast %7 : vector<1x256xf32> to vector<2x256xf32>
    %22 = arith.addf %20, %21 : vector<2x256xf32>
    %23 = vector.extract_strided_slice %22 {offsets = [0, 0], sizes = [2, 192], strides = [1, 1]} : vector<2x256xf32> to vector<2x192xf32>
    %24 = arith.negf %23 : vector<2x192xf32>
    %25 = math.exp %24 : vector<2x192xf32>
    %cst_9 = arith.constant 1.000000e+00 : f32
    %26 = vector.broadcast %cst_9 : f32 to vector<2x192xf32>
    %27 = arith.addf %26, %25 : vector<2x192xf32>
    %28 = arith.divf %26, %27 : vector<2x192xf32>
    %29 = vector.extract_strided_slice %22 {offsets = [0, 192], sizes = [2, 64], strides = [1, 1]} : vector<2x256xf32> to vector<2x64xf32>
    %30 = math.tanh %29 : vector<2x64xf32>
    %31 = vector.extract_strided_slice %28 {offsets = [0, 0], sizes = [2, 64], strides = [1, 1]} : vector<2x192xf32> to vector<2x64xf32>
    %32 = vector.extract_strided_slice %28 {offsets = [0, 64], sizes = [2, 64], strides = [1, 1]} : vector<2x192xf32> to vector<2x64xf32>
    %33 = vector.extract_strided_slice %28 {offsets = [0, 128], sizes = [2, 64], strides = [1, 1]} : vector<2x192xf32> to vector<2x64xf32>
    %34 = arith.mulf %32, %9 : vector<2x64xf32>
    %35 = arith.mulf %31, %30 : vector<2x64xf32>
    %36 = arith.addf %34, %35 : vector<2x64xf32>
    %37 = math.tanh %36 : vector<2x64xf32>
    %38 = arith.mulf %33, %37 : vector<2x64xf32>
    %39 = vector.extract_strided_slice %4 {offsets = [0, 1, 0], sizes = [2, 1, 2], strides = [1, 1, 1]} : vector<2x8x2xf32> to vector<2x1x2xf32>
    %40 = vector.shape_cast %39 : vector<2x1x2xf32> to vector<2x2xf32>
    %41 = vector.extract_strided_slice %40 {offsets = [0, 0], sizes = [2, 1], strides = [1, 1]} : vector<2x2xf32> to vector<2x1xf32>
    %42 = vector.broadcast %41 : vector<2x1xf32> to vector<2x256xf32>
    %43 = vector.broadcast %5 : vector<1x256xf32> to vector<2x256xf32>
    %44 = arith.mulf %42, %43 : vector<2x256xf32>
    %45 = vector.extract_strided_slice %40 {offsets = [0, 1], sizes = [2, 1], strides = [1, 1]} : vector<2x2xf32> to vector<2x1xf32>
    %46 = vector.broadcast %45 : vector<2x1xf32> to vector<2x256xf32>
    %47 = vector.broadcast %6 : vector<1x256xf32> to vector<2x256xf32>
    %48 = arith.mulf %46, %47 : vector<2x256xf32>
    %49 = arith.addf %44, %48 : vector<2x256xf32>
    %50 = vector.broadcast %7 : vector<1x256xf32> to vector<2x256xf32>
    %51 = arith.addf %49, %50 : vector<2x256xf32>
    %52 = arith.truncf %38 : vector<2x64xf32> to vector<2x64xbf16>
    %cst_10 = arith.constant dense<0.000000e+00> : vector<2x256xf32>
    %53 = tpu.matmul %52, %8, %cst_10 {dimension_numbers = #tpu.dot_dimension_numbers<[1], [0], [0], [1], [0, 0, 1, 1], [], []>} : vector<2x64xbf16>, vector<64x256xbf16>, vector<2x256xf32> -> vector<2x256xf32>
    %54 = arith.addf %51, %53 : vector<2x256xf32>
    %55 = vector.extract_strided_slice %54 {offsets = [0, 0], sizes = [2, 192], strides = [1, 1]} : vector<2x256xf32> to vector<2x192xf32>
    %56 = arith.negf %55 : vector<2x192xf32>
    %57 = math.exp %56 : vector<2x192xf32>
    %cst_11 = arith.constant 1.000000e+00 : f32
    %58 = vector.broadcast %cst_11 : f32 to vector<2x192xf32>
    %59 = arith.addf %58, %57 : vector<2x192xf32>
    %60 = arith.divf %58, %59 : vector<2x192xf32>
    %61 = vector.extract_strided_slice %54 {offsets = [0, 192], sizes = [2, 64], strides = [1, 1]} : vector<2x256xf32> to vector<2x64xf32>
    %62 = math.tanh %61 : vector<2x64xf32>
    %63 = vector.extract_strided_slice %60 {offsets = [0, 0], sizes = [2, 64], strides = [1, 1]} : vector<2x192xf32> to vector<2x64xf32>
    %64 = vector.extract_strided_slice %60 {offsets = [0, 64], sizes = [2, 64], strides = [1, 1]} : vector<2x192xf32> to vector<2x64xf32>
    %65 = vector.extract_strided_slice %60 {offsets = [0, 128], sizes = [2, 64], strides = [1, 1]} : vector<2x192xf32> to vector<2x64xf32>
    %66 = arith.mulf %64, %36 : vector<2x64xf32>
    %67 = arith.mulf %63, %62 : vector<2x64xf32>
    %68 = arith.addf %66, %67 : vector<2x64xf32>
    %69 = math.tanh %68 : vector<2x64xf32>
    %70 = arith.mulf %65, %69 : vector<2x64xf32>
    %71 = vector.extract_strided_slice %4 {offsets = [0, 2, 0], sizes = [2, 1, 2], strides = [1, 1, 1]} : vector<2x8x2xf32> to vector<2x1x2xf32>
    %72 = vector.shape_cast %71 : vector<2x1x2xf32> to vector<2x2xf32>
    %73 = vector.extract_strided_slice %72 {offsets = [0, 0], sizes = [2, 1], strides = [1, 1]} : vector<2x2xf32> to vector<2x1xf32>
    %74 = vector.broadcast %73 : vector<2x1xf32> to vector<2x256xf32>
    %75 = vector.broadcast %5 : vector<1x256xf32> to vector<2x256xf32>
    %76 = arith.mulf %74, %75 : vector<2x256xf32>
    %77 = vector.extract_strided_slice %72 {offsets = [0, 1], sizes = [2, 1], strides = [1, 1]} : vector<2x2xf32> to vector<2x1xf32>
    %78 = vector.broadcast %77 : vector<2x1xf32> to vector<2x256xf32>
    %79 = vector.broadcast %6 : vector<1x256xf32> to vector<2x256xf32>
    %80 = arith.mulf %78, %79 : vector<2x256xf32>
    %81 = arith.addf %76, %80 : vector<2x256xf32>
    %82 = vector.broadcast %7 : vector<1x256xf32> to vector<2x256xf32>
    %83 = arith.addf %81, %82 : vector<2x256xf32>
    %84 = arith.truncf %70 : vector<2x64xf32> to vector<2x64xbf16>
    %cst_12 = arith.constant dense<0.000000e+00> : vector<2x256xf32>
    %85 = tpu.matmul %84, %8, %cst_12 {dimension_numbers = #tpu.dot_dimension_numbers<[1], [0], [0], [1], [0, 0, 1, 1], [], []>} : vector<2x64xbf16>, vector<64x256xbf16>, vector<2x256xf32> -> vector<2x256xf32>
    %86 = arith.addf %83, %85 : vector<2x256xf32>
    %87 = vector.extract_strided_slice %86 {offsets = [0, 0], sizes = [2, 192], strides = [1, 1]} : vector<2x256xf32> to vector<2x192xf32>
    %88 = arith.negf %87 : vector<2x192xf32>
    %89 = math.exp %88 : vector<2x192xf32>
    %cst_13 = arith.constant 1.000000e+00 : f32
    %90 = vector.broadcast %cst_13 : f32 to vector<2x192xf32>
    %91 = arith.addf %90, %89 : vector<2x192xf32>
    %92 = arith.divf %90, %91 : vector<2x192xf32>
    %93 = vector.extract_strided_slice %86 {offsets = [0, 192], sizes = [2, 64], strides = [1, 1]} : vector<2x256xf32> to vector<2x64xf32>
    %94 = math.tanh %93 : vector<2x64xf32>
    %95 = vector.extract_strided_slice %92 {offsets = [0, 0], sizes = [2, 64], strides = [1, 1]} : vector<2x192xf32> to vector<2x64xf32>
    %96 = vector.extract_strided_slice %92 {offsets = [0, 64], sizes = [2, 64], strides = [1, 1]} : vector<2x192xf32> to vector<2x64xf32>
    %97 = vector.extract_strided_slice %92 {offsets = [0, 128], sizes = [2, 64], strides = [1, 1]} : vector<2x192xf32> to vector<2x64xf32>
    %98 = arith.mulf %96, %68 : vector<2x64xf32>
    %99 = arith.mulf %95, %94 : vector<2x64xf32>
    %100 = arith.addf %98, %99 : vector<2x64xf32>
    %101 = math.tanh %100 : vector<2x64xf32>
    %102 = arith.mulf %97, %101 : vector<2x64xf32>
    %103 = vector.extract_strided_slice %4 {offsets = [0, 3, 0], sizes = [2, 1, 2], strides = [1, 1, 1]} : vector<2x8x2xf32> to vector<2x1x2xf32>
    %104 = vector.shape_cast %103 : vector<2x1x2xf32> to vector<2x2xf32>
    %105 = vector.extract_strided_slice %104 {offsets = [0, 0], sizes = [2, 1], strides = [1, 1]} : vector<2x2xf32> to vector<2x1xf32>
    %106 = vector.broadcast %105 : vector<2x1xf32> to vector<2x256xf32>
    %107 = vector.broadcast %5 : vector<1x256xf32> to vector<2x256xf32>
    %108 = arith.mulf %106, %107 : vector<2x256xf32>
    %109 = vector.extract_strided_slice %104 {offsets = [0, 1], sizes = [2, 1], strides = [1, 1]} : vector<2x2xf32> to vector<2x1xf32>
    %110 = vector.broadcast %109 : vector<2x1xf32> to vector<2x256xf32>
    %111 = vector.broadcast %6 : vector<1x256xf32> to vector<2x256xf32>
    %112 = arith.mulf %110, %111 : vector<2x256xf32>
    %113 = arith.addf %108, %112 : vector<2x256xf32>
    %114 = vector.broadcast %7 : vector<1x256xf32> to vector<2x256xf32>
    %115 = arith.addf %113, %114 : vector<2x256xf32>
    %116 = arith.truncf %102 : vector<2x64xf32> to vector<2x64xbf16>
    %cst_14 = arith.constant dense<0.000000e+00> : vector<2x256xf32>
    %117 = tpu.matmul %116, %8, %cst_14 {dimension_numbers = #tpu.dot_dimension_numbers<[1], [0], [0], [1], [0, 0, 1, 1], [], []>} : vector<2x64xbf16>, vector<64x256xbf16>, vector<2x256xf32> -> vector<2x256xf32>
    %118 = arith.addf %115, %117 : vector<2x256xf32>
    %119 = vector.extract_strided_slice %118 {offsets = [0, 0], sizes = [2, 192], strides = [1, 1]} : vector<2x256xf32> to vector<2x192xf32>
    %120 = arith.negf %119 : vector<2x192xf32>
    %121 = math.exp %120 : vector<2x192xf32>
    %cst_15 = arith.constant 1.000000e+00 : f32
    %122 = vector.broadcast %cst_15 : f32 to vector<2x192xf32>
    %123 = arith.addf %122, %121 : vector<2x192xf32>
    %124 = arith.divf %122, %123 : vector<2x192xf32>
    %125 = vector.extract_strided_slice %118 {offsets = [0, 192], sizes = [2, 64], strides = [1, 1]} : vector<2x256xf32> to vector<2x64xf32>
    %126 = math.tanh %125 : vector<2x64xf32>
    %127 = vector.extract_strided_slice %124 {offsets = [0, 0], sizes = [2, 64], strides = [1, 1]} : vector<2x192xf32> to vector<2x64xf32>
    %128 = vector.extract_strided_slice %124 {offsets = [0, 64], sizes = [2, 64], strides = [1, 1]} : vector<2x192xf32> to vector<2x64xf32>
    %129 = vector.extract_strided_slice %124 {offsets = [0, 128], sizes = [2, 64], strides = [1, 1]} : vector<2x192xf32> to vector<2x64xf32>
    %130 = arith.mulf %128, %100 : vector<2x64xf32>
    %131 = arith.mulf %127, %126 : vector<2x64xf32>
    %132 = arith.addf %130, %131 : vector<2x64xf32>
    %133 = math.tanh %132 : vector<2x64xf32>
    %134 = arith.mulf %129, %133 : vector<2x64xf32>
    %135 = vector.extract_strided_slice %4 {offsets = [0, 4, 0], sizes = [2, 1, 2], strides = [1, 1, 1]} : vector<2x8x2xf32> to vector<2x1x2xf32>
    %136 = vector.shape_cast %135 : vector<2x1x2xf32> to vector<2x2xf32>
    %137 = vector.extract_strided_slice %136 {offsets = [0, 0], sizes = [2, 1], strides = [1, 1]} : vector<2x2xf32> to vector<2x1xf32>
    %138 = vector.broadcast %137 : vector<2x1xf32> to vector<2x256xf32>
    %139 = vector.broadcast %5 : vector<1x256xf32> to vector<2x256xf32>
    %140 = arith.mulf %138, %139 : vector<2x256xf32>
    %141 = vector.extract_strided_slice %136 {offsets = [0, 1], sizes = [2, 1], strides = [1, 1]} : vector<2x2xf32> to vector<2x1xf32>
    %142 = vector.broadcast %141 : vector<2x1xf32> to vector<2x256xf32>
    %143 = vector.broadcast %6 : vector<1x256xf32> to vector<2x256xf32>
    %144 = arith.mulf %142, %143 : vector<2x256xf32>
    %145 = arith.addf %140, %144 : vector<2x256xf32>
    %146 = vector.broadcast %7 : vector<1x256xf32> to vector<2x256xf32>
    %147 = arith.addf %145, %146 : vector<2x256xf32>
    %148 = arith.truncf %134 : vector<2x64xf32> to vector<2x64xbf16>
    %cst_16 = arith.constant dense<0.000000e+00> : vector<2x256xf32>
    %149 = tpu.matmul %148, %8, %cst_16 {dimension_numbers = #tpu.dot_dimension_numbers<[1], [0], [0], [1], [0, 0, 1, 1], [], []>} : vector<2x64xbf16>, vector<64x256xbf16>, vector<2x256xf32> -> vector<2x256xf32>
    %150 = arith.addf %147, %149 : vector<2x256xf32>
    %151 = vector.extract_strided_slice %150 {offsets = [0, 0], sizes = [2, 192], strides = [1, 1]} : vector<2x256xf32> to vector<2x192xf32>
    %152 = arith.negf %151 : vector<2x192xf32>
    %153 = math.exp %152 : vector<2x192xf32>
    %cst_17 = arith.constant 1.000000e+00 : f32
    %154 = vector.broadcast %cst_17 : f32 to vector<2x192xf32>
    %155 = arith.addf %154, %153 : vector<2x192xf32>
    %156 = arith.divf %154, %155 : vector<2x192xf32>
    %157 = vector.extract_strided_slice %150 {offsets = [0, 192], sizes = [2, 64], strides = [1, 1]} : vector<2x256xf32> to vector<2x64xf32>
    %158 = math.tanh %157 : vector<2x64xf32>
    %159 = vector.extract_strided_slice %156 {offsets = [0, 0], sizes = [2, 64], strides = [1, 1]} : vector<2x192xf32> to vector<2x64xf32>
    %160 = vector.extract_strided_slice %156 {offsets = [0, 64], sizes = [2, 64], strides = [1, 1]} : vector<2x192xf32> to vector<2x64xf32>
    %161 = vector.extract_strided_slice %156 {offsets = [0, 128], sizes = [2, 64], strides = [1, 1]} : vector<2x192xf32> to vector<2x64xf32>
    %162 = arith.mulf %160, %132 : vector<2x64xf32>
    %163 = arith.mulf %159, %158 : vector<2x64xf32>
    %164 = arith.addf %162, %163 : vector<2x64xf32>
    %165 = math.tanh %164 : vector<2x64xf32>
    %166 = arith.mulf %161, %165 : vector<2x64xf32>
    %167 = vector.extract_strided_slice %4 {offsets = [0, 5, 0], sizes = [2, 1, 2], strides = [1, 1, 1]} : vector<2x8x2xf32> to vector<2x1x2xf32>
    %168 = vector.shape_cast %167 : vector<2x1x2xf32> to vector<2x2xf32>
    %169 = vector.extract_strided_slice %168 {offsets = [0, 0], sizes = [2, 1], strides = [1, 1]} : vector<2x2xf32> to vector<2x1xf32>
    %170 = vector.broadcast %169 : vector<2x1xf32> to vector<2x256xf32>
    %171 = vector.broadcast %5 : vector<1x256xf32> to vector<2x256xf32>
    %172 = arith.mulf %170, %171 : vector<2x256xf32>
    %173 = vector.extract_strided_slice %168 {offsets = [0, 1], sizes = [2, 1], strides = [1, 1]} : vector<2x2xf32> to vector<2x1xf32>
    %174 = vector.broadcast %173 : vector<2x1xf32> to vector<2x256xf32>
    %175 = vector.broadcast %6 : vector<1x256xf32> to vector<2x256xf32>
    %176 = arith.mulf %174, %175 : vector<2x256xf32>
    %177 = arith.addf %172, %176 : vector<2x256xf32>
    %178 = vector.broadcast %7 : vector<1x256xf32> to vector<2x256xf32>
    %179 = arith.addf %177, %178 : vector<2x256xf32>
    %180 = arith.truncf %166 : vector<2x64xf32> to vector<2x64xbf16>
    %cst_18 = arith.constant dense<0.000000e+00> : vector<2x256xf32>
    %181 = tpu.matmul %180, %8, %cst_18 {dimension_numbers = #tpu.dot_dimension_numbers<[1], [0], [0], [1], [0, 0, 1, 1], [], []>} : vector<2x64xbf16>, vector<64x256xbf16>, vector<2x256xf32> -> vector<2x256xf32>
    %182 = arith.addf %179, %181 : vector<2x256xf32>
    %183 = vector.extract_strided_slice %182 {offsets = [0, 0], sizes = [2, 192], strides = [1, 1]} : vector<2x256xf32> to vector<2x192xf32>
    %184 = arith.negf %183 : vector<2x192xf32>
    %185 = math.exp %184 : vector<2x192xf32>
    %cst_19 = arith.constant 1.000000e+00 : f32
    %186 = vector.broadcast %cst_19 : f32 to vector<2x192xf32>
    %187 = arith.addf %186, %185 : vector<2x192xf32>
    %188 = arith.divf %186, %187 : vector<2x192xf32>
    %189 = vector.extract_strided_slice %182 {offsets = [0, 192], sizes = [2, 64], strides = [1, 1]} : vector<2x256xf32> to vector<2x64xf32>
    %190 = math.tanh %189 : vector<2x64xf32>
    %191 = vector.extract_strided_slice %188 {offsets = [0, 0], sizes = [2, 64], strides = [1, 1]} : vector<2x192xf32> to vector<2x64xf32>
    %192 = vector.extract_strided_slice %188 {offsets = [0, 64], sizes = [2, 64], strides = [1, 1]} : vector<2x192xf32> to vector<2x64xf32>
    %193 = vector.extract_strided_slice %188 {offsets = [0, 128], sizes = [2, 64], strides = [1, 1]} : vector<2x192xf32> to vector<2x64xf32>
    %194 = arith.mulf %192, %164 : vector<2x64xf32>
    %195 = arith.mulf %191, %190 : vector<2x64xf32>
    %196 = arith.addf %194, %195 : vector<2x64xf32>
    %197 = math.tanh %196 : vector<2x64xf32>
    %198 = arith.mulf %193, %197 : vector<2x64xf32>
    %199 = vector.extract_strided_slice %4 {offsets = [0, 6, 0], sizes = [2, 1, 2], strides = [1, 1, 1]} : vector<2x8x2xf32> to vector<2x1x2xf32>
    %200 = vector.shape_cast %199 : vector<2x1x2xf32> to vector<2x2xf32>
    %201 = vector.extract_strided_slice %200 {offsets = [0, 0], sizes = [2, 1], strides = [1, 1]} : vector<2x2xf32> to vector<2x1xf32>
    %202 = vector.broadcast %201 : vector<2x1xf32> to vector<2x256xf32>
    %203 = vector.broadcast %5 : vector<1x256xf32> to vector<2x256xf32>
    %204 = arith.mulf %202, %203 : vector<2x256xf32>
    %205 = vector.extract_strided_slice %200 {offsets = [0, 1], sizes = [2, 1], strides = [1, 1]} : vector<2x2xf32> to vector<2x1xf32>
    %206 = vector.broadcast %205 : vector<2x1xf32> to vector<2x256xf32>
    %207 = vector.broadcast %6 : vector<1x256xf32> to vector<2x256xf32>
    %208 = arith.mulf %206, %207 : vector<2x256xf32>
    %209 = arith.addf %204, %208 : vector<2x256xf32>
    %210 = vector.broadcast %7 : vector<1x256xf32> to vector<2x256xf32>
    %211 = arith.addf %209, %210 : vector<2x256xf32>
    %212 = arith.truncf %198 : vector<2x64xf32> to vector<2x64xbf16>
    %cst_20 = arith.constant dense<0.000000e+00> : vector<2x256xf32>
    %213 = tpu.matmul %212, %8, %cst_20 {dimension_numbers = #tpu.dot_dimension_numbers<[1], [0], [0], [1], [0, 0, 1, 1], [], []>} : vector<2x64xbf16>, vector<64x256xbf16>, vector<2x256xf32> -> vector<2x256xf32>
    %214 = arith.addf %211, %213 : vector<2x256xf32>
    %215 = vector.extract_strided_slice %214 {offsets = [0, 0], sizes = [2, 192], strides = [1, 1]} : vector<2x256xf32> to vector<2x192xf32>
    %216 = arith.negf %215 : vector<2x192xf32>
    %217 = math.exp %216 : vector<2x192xf32>
    %cst_21 = arith.constant 1.000000e+00 : f32
    %218 = vector.broadcast %cst_21 : f32 to vector<2x192xf32>
    %219 = arith.addf %218, %217 : vector<2x192xf32>
    %220 = arith.divf %218, %219 : vector<2x192xf32>
    %221 = vector.extract_strided_slice %214 {offsets = [0, 192], sizes = [2, 64], strides = [1, 1]} : vector<2x256xf32> to vector<2x64xf32>
    %222 = math.tanh %221 : vector<2x64xf32>
    %223 = vector.extract_strided_slice %220 {offsets = [0, 0], sizes = [2, 64], strides = [1, 1]} : vector<2x192xf32> to vector<2x64xf32>
    %224 = vector.extract_strided_slice %220 {offsets = [0, 64], sizes = [2, 64], strides = [1, 1]} : vector<2x192xf32> to vector<2x64xf32>
    %225 = vector.extract_strided_slice %220 {offsets = [0, 128], sizes = [2, 64], strides = [1, 1]} : vector<2x192xf32> to vector<2x64xf32>
    %226 = arith.mulf %224, %196 : vector<2x64xf32>
    %227 = arith.mulf %223, %222 : vector<2x64xf32>
    %228 = arith.addf %226, %227 : vector<2x64xf32>
    %229 = math.tanh %228 : vector<2x64xf32>
    %230 = arith.mulf %225, %229 : vector<2x64xf32>
    %231 = vector.extract_strided_slice %4 {offsets = [0, 7, 0], sizes = [2, 1, 2], strides = [1, 1, 1]} : vector<2x8x2xf32> to vector<2x1x2xf32>
    %232 = vector.shape_cast %231 : vector<2x1x2xf32> to vector<2x2xf32>
    %233 = vector.extract_strided_slice %232 {offsets = [0, 0], sizes = [2, 1], strides = [1, 1]} : vector<2x2xf32> to vector<2x1xf32>
    %234 = vector.broadcast %233 : vector<2x1xf32> to vector<2x256xf32>
    %235 = vector.broadcast %5 : vector<1x256xf32> to vector<2x256xf32>
    %236 = arith.mulf %234, %235 : vector<2x256xf32>
    %237 = vector.extract_strided_slice %232 {offsets = [0, 1], sizes = [2, 1], strides = [1, 1]} : vector<2x2xf32> to vector<2x1xf32>
    %238 = vector.broadcast %237 : vector<2x1xf32> to vector<2x256xf32>
    %239 = vector.broadcast %6 : vector<1x256xf32> to vector<2x256xf32>
    %240 = arith.mulf %238, %239 : vector<2x256xf32>
    %241 = arith.addf %236, %240 : vector<2x256xf32>
    %242 = vector.broadcast %7 : vector<1x256xf32> to vector<2x256xf32>
    %243 = arith.addf %241, %242 : vector<2x256xf32>
    %244 = arith.truncf %230 : vector<2x64xf32> to vector<2x64xbf16>
    %cst_22 = arith.constant dense<0.000000e+00> : vector<2x256xf32>
    %245 = tpu.matmul %244, %8, %cst_22 {dimension_numbers = #tpu.dot_dimension_numbers<[1], [0], [0], [1], [0, 0, 1, 1], [], []>} : vector<2x64xbf16>, vector<64x256xbf16>, vector<2x256xf32> -> vector<2x256xf32>
    %246 = arith.addf %243, %245 : vector<2x256xf32>
    %247 = vector.extract_strided_slice %246 {offsets = [0, 0], sizes = [2, 192], strides = [1, 1]} : vector<2x256xf32> to vector<2x192xf32>
    %248 = arith.negf %247 : vector<2x192xf32>
    %249 = math.exp %248 : vector<2x192xf32>
    %cst_23 = arith.constant 1.000000e+00 : f32
    %250 = vector.broadcast %cst_23 : f32 to vector<2x192xf32>
    %251 = arith.addf %250, %249 : vector<2x192xf32>
    %252 = arith.divf %250, %251 : vector<2x192xf32>
    %253 = vector.extract_strided_slice %246 {offsets = [0, 192], sizes = [2, 64], strides = [1, 1]} : vector<2x256xf32> to vector<2x64xf32>
    %254 = math.tanh %253 : vector<2x64xf32>
    %255 = vector.extract_strided_slice %252 {offsets = [0, 0], sizes = [2, 64], strides = [1, 1]} : vector<2x192xf32> to vector<2x64xf32>
    %256 = vector.extract_strided_slice %252 {offsets = [0, 64], sizes = [2, 64], strides = [1, 1]} : vector<2x192xf32> to vector<2x64xf32>
    %257 = vector.extract_strided_slice %252 {offsets = [0, 128], sizes = [2, 64], strides = [1, 1]} : vector<2x192xf32> to vector<2x64xf32>
    %258 = arith.mulf %256, %228 : vector<2x64xf32>
    %259 = arith.mulf %255, %254 : vector<2x64xf32>
    %260 = arith.addf %258, %259 : vector<2x64xf32>
    %261 = math.tanh %260 : vector<2x64xf32>
    %262 = arith.mulf %257, %261 : vector<2x64xf32>
    %c0_i32_24 = arith.constant 0 : i32
    %263 = tpu.memref_slice %arg9[%c0_i32_24] : memref<2x!tpu.dma_semaphore, #tpu.memory_space<semaphore_mem>> -> memref<1x!tpu.dma_semaphore, #tpu.memory_space<semaphore_mem>>
    %264 = tpu.memref_squeeze %263 : memref<1x!tpu.dma_semaphore, #tpu.memory_space<semaphore_mem>> -> memref<!tpu.dma_semaphore, #tpu.memory_space<semaphore_mem>>
    tpu.wait_dma2 semaphore(%264 : memref<!tpu.dma_semaphore, #tpu.memory_space<semaphore_mem>>) src(%arg4 : memref<64x128xbf16, #tpu.memory_space<any>>) dst(%arg7 : memref<64x128xbf16, #tpu.memory_space<vmem>>)
    %c1_i32_25 = arith.constant 1 : i32
    %265 = tpu.memref_slice %arg9[%c1_i32_25] : memref<2x!tpu.dma_semaphore, #tpu.memory_space<semaphore_mem>> -> memref<1x!tpu.dma_semaphore, #tpu.memory_space<semaphore_mem>>
    %266 = tpu.memref_squeeze %265 : memref<1x!tpu.dma_semaphore, #tpu.memory_space<semaphore_mem>> -> memref<!tpu.dma_semaphore, #tpu.memory_space<semaphore_mem>>
    tpu.wait_dma2 semaphore(%266 : memref<!tpu.dma_semaphore, #tpu.memory_space<semaphore_mem>>) src(%arg5 : memref<1x128xf32, #tpu.memory_space<any>>) dst(%arg8 : memref<1x128xf32, #tpu.memory_space<vmem>>)
    %267 = arith.truncf %262 : vector<2x64xf32> to vector<2x64xbf16>
    %c0_26 = arith.constant 0 : index
    %c0_27 = arith.constant 0 : index
    %268 = vector.load %arg7[%c0_26, %c0_27] : memref<64x128xbf16, #tpu.memory_space<vmem>>, vector<64x128xbf16>
    %cst_28 = arith.constant dense<0.000000e+00> : vector<2x128xf32>
    %269 = tpu.matmul %267, %268, %cst_28 {dimension_numbers = #tpu.dot_dimension_numbers<[1], [0], [0], [1], [0, 0, 1, 1], [], []>} : vector<2x64xbf16>, vector<64x128xbf16>, vector<2x128xf32> -> vector<2x128xf32>
    %c0_29 = arith.constant 0 : index
    %c0_30 = arith.constant 0 : index
    %270 = vector.load %arg8[%c0_29, %c0_30] : memref<1x128xf32, #tpu.memory_space<vmem>>, vector<1x128xf32>
    %271 = vector.broadcast %270 : vector<1x128xf32> to vector<2x128xf32>
    %272 = arith.addf %269, %271 : vector<2x128xf32>
    %c0_31 = arith.constant 0 : index
    %c0_32 = arith.constant 0 : index
    %273 = vector.load %arg6[%c0_31, %c0_32] : memref<2x128xf32, #tpu.memory_space<vmem>>, vector<2x128xf32>
    tpu.vector_store %arg6[%c0_31, %c0_32], %272 {strides = array<i32>} : memref<2x128xf32, #tpu.memory_space<vmem>>, vector<2x128xf32>,
    return
  }
}

</mosaic_0001>

<llo_original>
// kernel: controller_forward.1
$region0: #{controller_forward.1}
  #allocation0 [shape = 'u32[]', space=smem, size = 0x4, offset = 0x4, fixed_abs, tag = 'smem constant byte address 0x4 - core index']
  #allocation1 [shape = 'u32[144,128]{1,0:T(1,128)}', space=vmem, size = 0x12000, scoped, tag = 'internal scratch']
  #allocation2 [shape = 'bf16[64,128]{1,0:T(8,128)(2,1)}', space=vmem, size = 0x4000, scoped, tag = 'scratch operand']
  #allocation3 [shape = 'f32[1,128]{1,0:T(1,128)}', space=vmem, size = 0x200, scoped, tag = 'scratch operand']
  #allocation4 [shape = 's32[2]{0}', space=sflag, size = 0x8, scoped, tag = 'scratch operand']
  #allocation7 [shape = 's32[]', space=sflag, size = 0x4, offset = 0, fixed_abs, tag = 'sflag constant byte address 0x0 - dummy sync flag']
  #allocation8 [shape = 's32[]', space=sflag, size = 0x4, offset = 0, fixed_abs, tag = 'sflag constant byte address 0x0 - dummy sync flag']
  #allocation9 [shape = 'u32[]', space=smem, size = 0x4, offset = 0x44, fixed_abs, tag = 'smem constant byte address 0x44 - assertion arg 0']
  #allocation10 [shape = 'u32[]', space=smem, size = 0x4, offset = 0x48, fixed_abs, tag = 'smem constant byte address 0x48 - assertion arg 1']
  #allocation11 [shape = 's32[]', space=sflag, size = 0x4, offset = 0, fixed_abs, tag = 'sflag constant byte address 0x0 - dummy sync flag']
  %s0 = inlined_call_operand.vmem [shape: f32[2,8,2], index: 0, kind: input, shape index: {}]
  %s1 = inlined_call_operand.vmem [shape: f32[2,256], index: 1, kind: input, shape index: {}]
  %s2 = inlined_call_operand.hbm [shape: bf16[64,256], index: 2, kind: input, shape index: {}]
  %s3 = inlined_call_operand.vmem [shape: f32[1,256], index: 3, kind: input, shape index: {}]
  %s4 = inlined_call_operand.hbm [shape: bf16[64,128], index: 4, kind: input, shape index: {}]
  %s5 = inlined_call_operand.vmem [shape: f32[1,128], index: 5, kind: input, shape index: {}]
  %s6 = inlined_call_operand.vmem [shape: f32[2,128], index: 6, kind: output, shape index: {}]
  %s7 = sld [smem:[#allocation0]]
  $region64: #{controller_forward.1} parent=0
    _
  %s9 = ssub.s32 1, %s7
  %s10 = scalar_select 0, %s9, %s7
  $region1: #{controller_forward.1} parent=0
    #allocation5 [shape = 'u8[32768]{0}', space=vmem, size = 0x8000, scoped, tag = 'input window, operand 2, single buffered']
    #allocation6 [shape = 's32[1]{0}', space=sflag, size = 0x4, scoped, tag = 'scoped memory for controller_forward.1']
    %11 = vsyncpa [#allocation6], 0
    // Predicated region
    $region2: #{controller_forward.1} parent=1 // pred_check
      _
    $region3: #{controller_forward.1} parent=1 // pred_check_branch
      %13 = sbr.rel (0) target = $region5
    $region4: #{controller_forward.1} parent=1 // pred_region
      _
    $region5: #{controller_forward.1} parent=1 // pred_fallthru
      _
    // Predicated region
    $region6: #{controller_forward.1} parent=1 // pred_check
      _
    $region7: #{controller_forward.1} parent=1 // pred_check_branch
      %15 = sbr.rel (0) target = $region9
    $region8: #{controller_forward.1} parent=1 // pred_region
      _
    $region9: #{controller_forward.1} parent=1 // pred_fallthru
      _
    // Predicated region
    $region10: #{controller_forward.1} parent=1 // pred_check
      _
    $region11: #{controller_forward.1} parent=1 // pred_check_branch
      %17 = sbr.rel (0) target = $region13
    $region12: #{controller_forward.1} parent=1 // pred_region
      %s19 = ssub.s32 1024, 1024
      %20 = vsyncadd [#allocation6], %s19
      %s21 = sshll.u32 [#allocation5], 4
      %s22 = int_to_ptr.vmem [resolvable:$true] %s21
      %27 = dma.hbm_to_vmem [thread:$0]  %s2, 1024, %s22, [#allocation6], 128, 128, 8
    $region13: #{controller_forward.1} parent=1 // pred_fallthru
      _
    // Predicated region
    $region14: #{controller_forward.1} parent=1 // pred_check
      _
    $region15: #{controller_forward.1} parent=1 // pred_check_branch
      %29 = sbr.rel (0) target = $region17
    $region16: #{controller_forward.1} parent=1 // pred_region
      _
    $region17: #{controller_forward.1} parent=1 // pred_fallthru
      _
    // Predicated region
    $region18: #{controller_forward.1} parent=1 // pred_check
      _
    $region19: #{controller_forward.1} parent=1 // pred_check_branch
      %31 = sbr.rel (0) target = $region21
    $region20: #{controller_forward.1} parent=1 // pred_region
      %32 = dma.done [#allocation6], 1024
    $region21: #{controller_forward.1} parent=1 // pred_fallthru
      _
    // Predicated region
    $region22: #{controller_forward.1} parent=1 // pred_check
      _
    $region23: #{controller_forward.1} parent=1 // pred_check_branch
      %35 = sbr.rel target = $region25
    $region24: #{controller_forward.1} parent=1 // pred_region
      %36 = sst [smem:[#allocation9]] [#allocation8]
      %37 = sst [smem:[#allocation10]] [#allocation7]
    $region25: #{controller_forward.1} parent=1 // pred_fallthru
      _
    %39 = shalt.err (0)
    %s41 = sshll.u32 [#allocation2], 4
    %s42 = int_to_ptr.vmem [resolvable:$true] %s41
    %44 = dma.hbm_to_vmem [thread:$0]  %s4, 512, %s42, [#allocation4]
    %s45 = scalar_lea.sflag [#allocation4], 1
    %p47 = scmp.lt.u32.totalorder 1, 8
    %p48 = pneg %p47
    // Predicated region
    $region26: #{controller_forward.1} parent=1 // pred_check
      _
    $region27: #{controller_forward.1} parent=1 // pred_check_branch
      %50 = sbr.rel (%p47) target = $region29
    $region28: #{controller_forward.1} parent=1 // pred_region
      %s66 = sand.u32 1, 7
      %p67 = scmp.eq.s32.totalorder %s66, 0
      %p68 = pneg %p67
      // Predicated region
      $region41: #{controller_forward.1} parent=28 // pred_check
        _
      $region42: #{controller_forward.1} parent=28 // pred_check_branch
        %70 = sbr.rel (%p67) target = $region44
      $region43: #{controller_forward.1} parent=28 // pred_region
        %s71 = sand.u32 1, 7
        %s72 = ssub.s32 1, %s71
        %s73 = scalar_lea.vmem %s5, %s72
        %s74 = ssub.s32 1, %s71
        %s75 = scalar_lea.vmem [#allocation3], %s74
        %s76 = sshll.u32 1, %s71
        %s77 = ssub.s32 %s76, 1
        loop: start=0, step=1, limit=1
        $region45: #{controller_forward.1} parent=43 // loop_pre_header
          _
        $region46: #{controller_forward.1} parent=43 // loop_header
          %s79 = sphi 0, %s83
          %p80 = scmp.ge.s32.totalorder %s79, 1
          %s84 = sphi %s73, %s73
          %s85 = sphi %s75, %s75
        $region47: #{controller_forward.1} parent=43 // loop_header_branch
          %82 = sbr.rel (%p80) target = $region51
        $region48: #{controller_forward.1} parent=43 // loop_body
          %v86 = vld [vmem:[%s84] sm:%s77]
          %87 = vst [vmem:[%s85] sm:%s77] %v86
        $region49: #{controller_forward.1} parent=43 // loop_footer
          %s83 = sadd.s32 1, %s79
        $region50: #{controller_forward.1} parent=43 // loop_footer_branch
          %78 = sbr.rel target = $region46
        $region51: #{controller_forward.1} parent=43 // loop_exit
          _
      $region44: #{controller_forward.1} parent=28 // pred_fallthru
        _
    $region29: #{controller_forward.1} parent=1 // pred_fallthru
      _
    // Predicated region
    $region30: #{controller_forward.1} parent=1 // pred_check
      %p51 = pneg %p47
    $region31: #{controller_forward.1} parent=1 // pred_check_branch
      %53 = sbr.rel (%p51) target = $region33
    $region32: #{controller_forward.1} parent=1 // pred_region
      %s54 = sshll.u32 1, 1
      %s55 = ssub.s32 %s54, 1
      loop: start=0, step=1, limit=1
      $region34: #{controller_forward.1} parent=32 // loop_pre_header
        _
      $region35: #{controller_forward.1} parent=32 // loop_header
        %s57 = sphi 0, %s61
        %p58 = scmp.ge.s32.totalorder %s57, 1
        %s62 = sphi %s5, %s5
        %s63 = sphi [#allocation3], [#allocation3]
      $region36: #{controller_forward.1} parent=32 // loop_header_branch
        %60 = sbr.rel (%p58) target = $region40
      $region37: #{controller_forward.1} parent=32 // loop_body
        %v64 = vld [vmem:[%s62] sm:%s55]
        %65 = vst [vmem:[%s63] sm:%s55] %v64
      $region38: #{controller_forward.1} parent=32 // loop_footer
        %s61 = sadd.s32 1, %s57
      $region39: #{controller_forward.1} parent=32 // loop_footer_branch
        %56 = sbr.rel target = $region35
      $region40: #{controller_forward.1} parent=32 // loop_exit
        _
    $region33: #{controller_forward.1} parent=1 // pred_fallthru
      _
    // Predicated region
    $region52: #{controller_forward.1} parent=1 // pred_check
      _
    $region53: #{controller_forward.1} parent=1 // pred_check_branch
      %90 = sbr.rel (0) target = $region55
    $region54: #{controller_forward.1} parent=1 // pred_region
      %91 = vsyncadd %s45, 16
    $region55: #{controller_forward.1} parent=1 // pred_fallthru
      _
    %v92 = vld [vmem:[%s0] sm:$0xff]
    %v93 = vld [vmem:[%s0 + $0x8] sm:$0xff]
    %v94 = vld [vmem:[%s1] ss:$2 sm:$0x3]
    %s95 = scalar_lea.vmem %s1, 1
    %v96 = vld [vmem:[%s95] ss:$2 sm:$0x3]
    %v97 = vld [vmem:[%s3] sm:$0x3]
    %v98 = vld [vmem:[#allocation5] sm:$0xff]
    %v99 = vld [vmem:[#allocation5 + $0x8] sm:$0xff]
    %v100 = vld [vmem:[#allocation5 + $0x10] sm:$0xff]
    %v101 = vld [vmem:[#allocation5 + $0x18] sm:$0xff]
    %v102 = vld [vmem:[#allocation5 + $0x20] sm:$0xff]
    %v103 = vld [vmem:[#allocation5 + $0x28] sm:$0xff]
    %v104 = vld [vmem:[#allocation5 + $0x30] sm:$0xff]
    %v105 = vld [vmem:[#allocation5 + $0x38] sm:$0xff]
    %107 = vset.pattern.permute.xlu0 0
    %108 = vperm.xlu0 %107, %v92
    %v109 = vpop.permute.xlu0 %108
    %112 = vset.pattern.permute.xlu0 0
    %113 = vperm.xlu0 %112, %v93
    %v114 = vpop.permute.xlu0 %113
    %v117 = vlaneseq
    %v118 = vshrl.u32 %v117, 7
    %v119 = vsub.s32 0, %v118
    %v120 = vrot.slane %v94, %v119
    %v121 = vlaneseq
    %v122 = vshrl.u32 %v121, 7
    %v123 = vsub.s32 1, %v122
    %v124 = vrot.slane %v94, %v123
    %v127 = vmul.f32 %v109, %v120
    %v128 = vmul.f32 %v109, %v124
    %v129 = vmul.f32 %v114, %v120
    %v130 = vmul.f32 %v114, %v124
    %131 = vset.pattern.permute.xlu0 1
    %132 = vperm.xlu0 %131, %v92
    %v133 = vpop.permute.xlu0 %132
    %135 = vset.pattern.permute.xlu0 1
    %136 = vperm.xlu0 %135, %v93
    %v137 = vpop.permute.xlu0 %136
    %v140 = vlaneseq
    %v141 = vshrl.u32 %v140, 7
    %v142 = vsub.s32 0, %v141
    %v143 = vrot.slane %v96, %v142
    %v144 = vlaneseq
    %v145 = vshrl.u32 %v144, 7
    %v146 = vsub.s32 1, %v145
    %v147 = vrot.slane %v96, %v146
    %v150 = vmul.f32 %v133, %v143
    %v151 = vmul.f32 %v133, %v147
    %v152 = vmul.f32 %v137, %v143
    %v153 = vmul.f32 %v137, %v147
    %v154 = vadd.f32 %v127, %v150
    %v155 = vadd.f32 %v128, %v151
    %v156 = vadd.f32 %v129, %v152
    %v157 = vadd.f32 %v130, %v153
    %v159 = vlaneseq
    %v160 = vshrl.u32 %v159, 7
    %v161 = vsub.s32 0, %v160
    %v162 = vrot.slane %v97, %v161
    %v163 = vlaneseq
    %v164 = vshrl.u32 %v163, 7
    %v165 = vsub.s32 1, %v164
    %v166 = vrot.slane %v97, %v165
    %v169 = vadd.f32 %v154, %v162
    %v170 = vadd.f32 %v155, %v166
    %v171 = vadd.f32 %v156, %v162
    %v172 = vadd.f32 %v157, %v166
    %v173 = vxor.u32 %v169, 2147483648
    %v174 = vxor.u32 %v170, 2147483648
    %v175 = vxor.u32 %v171, 2147483648
    %v176 = vxor.u32 %v172, 2147483648
    %v177 = vmul.f32 %v173, 1.442695
    %v178 = vpow.pop %v177
    %v179 = vmul.f32 %v174, 1.442695
    %v180 = vpow.pop %v179
    %v181 = vmul.f32 %v175, 1.442695
    %v182 = vpow.pop %v181
    %v183 = vmul.f32 %v176, 1.442695
    %v184 = vpow.pop %v183
    %v185 = vadd.f32 %v178, 1.0
    %v186 = vadd.f32 %v180, 1.0
    %v187 = vadd.f32 %v182, 1.0
    %v188 = vadd.f32 %v184, 1.0
    %v189 = vrcp.pop %v185
    %v190 = vmul.f32 1.0, %v189
    %v191 = vrcp.pop %v186
    %v192 = vmul.f32 1.0, %v191
    %v193 = vrcp.pop %v187
    %v194 = vmul.f32 1.0, %v193
    %v195 = vrcp.pop %v188
    %v196 = vmul.f32 1.0, %v195
    %v197 = vtanh.pop %v170
    %v198 = vtanh.pop %v172
    %v199 = vmul.f32 %v190, 0.0
    %v200 = vmul.f32 %v194, 0.0
    %203 = vrot.lane.b32.xlu0 %v197, 64
    %v204 = vpop.permute.xlu0 %203
    %205 = vrot.lane.b32.xlu0 %v198, 64
    %v206 = vpop.permute.xlu0 %205
    %v209 = vmul.f32 %v190, %v204
    %v210 = vmul.f32 %v194, %v206
    %213 = vrot.lane.b32.xlu0 %v209, 64
    %v214 = vpop.permute.xlu0 %213
    %215 = vrot.lane.b32.xlu0 %v210, 64
    %v216 = vpop.permute.xlu0 %215
    %v219 = vadd.f32 %v199, %v214
    %v220 = vadd.f32 %v200, %v216
    %v221 = vtanh.pop %v219
    %v222 = vtanh.pop %v220
    %225 = vrot.lane.b32.xlu0 %v221, 64
    %v226 = vpop.permute.xlu0 %225
    %227 = vrot.lane.b32.xlu0 %v222, 64
    %v228 = vpop.permute.xlu0 %227
    %v231 = vmul.f32 %v192, %v226
    %v232 = vmul.f32 %v196, %v228
    %v233 = vpack.c.bf16 %v231, %v231
    %v234 = vpack.c.bf16 %v232, %v232
    %v237 = vunpack.c.l.b16 %v233
    %v238 = vunpack.c.l.b16 %v234
    %v239 = vrot.slane %v238, 7
    %vm240 = vcmask 1041409
    %v241 = vsel %vm240, %v239, %v237
    %v242 = vpack.c.b16 %v241, %v241
    %v251 = vunpack.c.l.b16 %v98
    %v252 = vunpack.c.h.b16 %v98
    %v253 = vunpack.c.l.b16 %v99
    %v254 = vunpack.c.h.b16 %v99
    %v255 = vunpack.c.l.b16 %v100
    %v256 = vunpack.c.h.b16 %v100
    %v257 = vunpack.c.l.b16 %v101
    %v258 = vunpack.c.h.b16 %v101
    %v259 = vunpack.c.l.b16 %v102
    %v260 = vunpack.c.h.b16 %v102
    %v261 = vunpack.c.l.b16 %v103
    %v262 = vunpack.c.h.b16 %v103
    %v263 = vunpack.c.l.b16 %v104
    %v264 = vunpack.c.h.b16 %v104
    %v265 = vunpack.c.l.b16 %v105
    %v266 = vunpack.c.h.b16 %v105
    %v267 = vpack.c.b16 %v253, %v251
    %v268 = vpack.c.b16 %v254, %v252
    %v269 = vpack.c.b16 %v257, %v255
    %v270 = vpack.c.b16 %v258, %v256
    %v271 = vpack.c.b16 %v261, %v259
    %v272 = vpack.c.b16 %v262, %v260
    %v273 = vpack.c.b16 %v265, %v263
    %v274 = vpack.c.b16 %v266, %v264
    %vm283 = vcmask 523264
    %v285 = vsel %vm283, %v242, 0
    %287 = vmatprep.subr.bf16.mxu0 0
    %288 = vmatpush1.bf16.msra.mxu0 0
    %289 = vmatprep.subr.bf16.mxu0 0
    %290 = vmatpush1.bf16.msra.mxu0 0
    %291 = vmatprep.subr.bf16.mxu0 0
    %292 = vmatpush1.bf16.msra.mxu0 0
    %293 = vmatprep.subr.bf16.mxu0 0
    %294 = vmatpush1.bf16.msra.mxu0 0
    %295 = vmatprep.subr.bf16.mxu0 %v274
    %296 = vmatpush1.bf16.msra.mxu0 %v273
    %297 = vmatprep.subr.bf16.mxu0 %v272
    %298 = vmatpush1.bf16.msra.mxu0 %v271
    %299 = vmatprep.subr.bf16.mxu0 %v270
    %300 = vmatpush1.bf16.msra.mxu0 %v269
    %301 = vmatprep.subr.bf16.mxu0 %v268
    %302 = vmatpush1.bf16.msra.mxu0 %v267
    %303 = vmatprep.subr.bf16.mxu0 0
    %304 = vmatpush2.bf16.msra.mxu0 0
    %305 = vmatprep.subr.bf16.mxu0 0
    %306 = vmatpush2.bf16.msra.mxu0 0
    %307 = vmatprep.subr.bf16.mxu0 0
    %308 = vmatpush2.bf16.msra.mxu0 0
    %309 = vmatprep.subr.bf16.mxu0 0
    %310 = vmatpush2.bf16.msra.mxu0 0
    %311 = vmatprep.subr.bf16.mxu0 0
    %312 = vmatpush2.bf16.msra.mxu0 0
    %313 = vmatprep.subr.bf16.mxu0 0
    %314 = vmatpush2.bf16.msra.mxu0 0
    %315 = vmatprep.subr.bf16.mxu0 0
    %316 = vmatpush2.bf16.msra.mxu0 0
    %317 = vmatprep.subr.bf16.mxu0 0
    %318 = vmatpush2.bf16.msra.mxu0 0
    %319 = vmatprep.mubr.bf16.mxu0 0
    %320 = vmatmul.mubr.bf16.gmra.mxu0 %v285
    %v321 = vpop.f32.mrf.mxu0
    %v322 = vadd.f32 0.0, %v321
    %v323 = vpop.f32.mrf.mxu0
    %v324 = vadd.f32 0.0, %v323
    %v325 = vpop.f32.mrf.mxu0
    %v326 = vpop.f32.mrf.mxu0
    %327 = vdwg.mxu0
    %v330 = vrot.slane %v322, 7
    %v331 = vrot.slane %v324, 7
    %v336 = vadd.f32 %v169, %v330
    %v337 = vadd.f32 %v170, %v331
    %v338 = vadd.f32 %v171, %v322
    %v339 = vadd.f32 %v172, %v324
    %v340 = vxor.u32 %v336, 2147483648
    %v341 = vxor.u32 %v337, 2147483648
    %v342 = vxor.u32 %v338, 2147483648
    %v343 = vxor.u32 %v339, 2147483648
    %v344 = vmul.f32 %v340, 1.442695
    %v345 = vpow.pop %v344
    %v346 = vmul.f32 %v341, 1.442695
    %v347 = vpow.pop %v346
    %v348 = vmul.f32 %v342, 1.442695
    %v349 = vpow.pop %v348
    %v350 = vmul.f32 %v343, 1.442695
    %v351 = vpow.pop %v350
    %v352 = vadd.f32 %v345, 1.0
    %v353 = vadd.f32 %v347, 1.0
    %v354 = vadd.f32 %v349, 1.0
    %v355 = vadd.f32 %v351, 1.0
    %v356 = vrcp.pop %v352
    %v357 = vmul.f32 1.0, %v356
    %v358 = vrcp.pop %v353
    %v359 = vmul.f32 1.0, %v358
    %v360 = vrcp.pop %v354
    %v361 = vmul.f32 1.0, %v360
    %v362 = vrcp.pop %v355
    %v363 = vmul.f32 1.0, %v362
    %v364 = vtanh.pop %v337
    %v365 = vtanh.pop %v339
    %v368 = vrot.slane %v219, 7
    %v369 = vrot.slane %v220, 7
    %v372 = vmul.f32 %v357, %v368
    %v373 = vmul.f32 %v361, %v369
    %376 = vrot.lane.b32.xlu0 %v364, 64
    %v377 = vpop.permute.xlu0 %376
    %378 = vrot.lane.b32.xlu0 %v365, 64
    %v379 = vpop.permute.xlu0 %378
    %v382 = vmul.f32 %v357, %v377
    %v383 = vmul.f32 %v361, %v379
    %386 = vrot.lane.b32.xlu0 %v382, 64
    %v387 = vpop.permute.xlu0 %386
    %388 = vrot.lane.b32.xlu0 %v383, 64
    %v389 = vpop.permute.xlu0 %388
    %v392 = vadd.f32 %v372, %v387
    %v393 = vadd.f32 %v373, %v389
    %v394 = vtanh.pop %v392
    %v395 = vtanh.pop %v393
    %398 = vrot.lane.b32.xlu0 %v394, 64
    %v399 = vpop.permute.xlu0 %398
    %400 = vrot.lane.b32.xlu0 %v395, 64
    %v401 = vpop.permute.xlu0 %400
    %v404 = vmul.f32 %v359, %v399
    %v405 = vmul.f32 %v363, %v401
    %v406 = vpack.c.bf16 %v404, %v404
    %v407 = vpack.c.bf16 %v405, %v405
    %v410 = vunpack.c.l.b16 %v406
    %v411 = vunpack.c.l.b16 %v407
    %v412 = vrot.slane %v410, 1
    %v413 = vsel %vm240, %v411, %v412
    %v414 = vpack.c.b16 %v413, %v413
    %v416 = vsel %vm283, %v414, 0
    %418 = vmatprep.subr.bf16.mxu0 0
    %419 = vmatpush1.bf16.msra.mxu0 0
    %420 = vmatprep.subr.bf16.mxu0 0
    %421 = vmatpush1.bf16.msra.mxu0 0
    %422 = vmatprep.subr.bf16.mxu0 0
    %423 = vmatpush1.bf16.msra.mxu0 0
    %424 = vmatprep.subr.bf16.mxu0 0
    %425 = vmatpush1.bf16.msra.mxu0 0
    %426 = vmatprep.subr.bf16.mxu0 %v274
    %427 = vmatpush1.bf16.msra.mxu0 %v273
    %428 = vmatprep.subr.bf16.mxu0 %v272
    %429 = vmatpush1.bf16.msra.mxu0 %v271
    %430 = vmatprep.subr.bf16.mxu0 %v270
    %431 = vmatpush1.bf16.msra.mxu0 %v269
    %432 = vmatprep.subr.bf16.mxu0 %v268
    %433 = vmatpush1.bf16.msra.mxu0 %v267
    %434 = vmatprep.subr.bf16.mxu0 0
    %435 = vmatpush2.bf16.msra.mxu0 0
    %436 = vmatprep.subr.bf16.mxu0 0
    %437 = vmatpush2.bf16.msra.mxu0 0
    %438 = vmatprep.subr.bf16.mxu0 0
    %439 = vmatpush2.bf16.msra.mxu0 0
    %440 = vmatprep.subr.bf16.mxu0 0
    %441 = vmatpush2.bf16.msra.mxu0 0
    %442 = vmatprep.subr.bf16.mxu0 0
    %443 = vmatpush2.bf16.msra.mxu0 0
    %444 = vmatprep.subr.bf16.mxu0 0
    %445 = vmatpush2.bf16.msra.mxu0 0
    %446 = vmatprep.subr.bf16.mxu0 0
    %447 = vmatpush2.bf16.msra.mxu0 0
    %448 = vmatprep.subr.bf16.mxu0 0
    %449 = vmatpush2.bf16.msra.mxu0 0
    %450 = vmatprep.mubr.bf16.mxu0 0
    %451 = vmatmul.mubr.bf16.gmra.mxu0 %v416
    %v452 = vpop.f32.mrf.mxu0
    %v453 = vadd.f32 0.0, %v452
    %v454 = vpop.f32.mrf.mxu0
    %v455 = vadd.f32 0.0, %v454
    %v456 = vpop.f32.mrf.mxu0
    %v457 = vpop.f32.mrf.mxu0
    %458 = vdwg.mxu0
    %v461 = vrot.slane %v453, 6
    %v462 = vrot.slane %v455, 6
    %v463 = vrot.slane %v453, 7
    %v464 = vrot.slane %v455, 7
    %v469 = vadd.f32 %v169, %v461
    %v470 = vadd.f32 %v170, %v462
    %v471 = vadd.f32 %v171, %v463
    %v472 = vadd.f32 %v172, %v464
    %v473 = vxor.u32 %v469, 2147483648
    %v474 = vxor.u32 %v470, 2147483648
    %v475 = vxor.u32 %v471, 2147483648
    %v476 = vxor.u32 %v472, 2147483648
    %v477 = vmul.f32 %v473, 1.442695
    %v478 = vpow.pop %v477
    %v479 = vmul.f32 %v474, 1.442695
    %v480 = vpow.pop %v479
    %v481 = vmul.f32 %v475, 1.442695
    %v482 = vpow.pop %v481
    %v483 = vmul.f32 %v476, 1.442695
    %v484 = vpow.pop %v483
    %v485 = vadd.f32 %v478, 1.0
    %v486 = vadd.f32 %v480, 1.0
    %v487 = vadd.f32 %v482, 1.0
    %v488 = vadd.f32 %v484, 1.0
    %v489 = vrcp.pop %v485
    %v490 = vmul.f32 1.0, %v489
    %v491 = vrcp.pop %v486
    %v492 = vmul.f32 1.0, %v491
    %v493 = vrcp.pop %v487
    %v494 = vmul.f32 1.0, %v493
    %v495 = vrcp.pop %v488
    %v496 = vmul.f32 1.0, %v495
    %v497 = vtanh.pop %v470
    %v498 = vtanh.pop %v472
    %v501 = vrot.slane %v392, 7
    %v502 = vrot.slane %v393, 7
    %v505 = vmul.f32 %v490, %v501
    %v506 = vmul.f32 %v494, %v502
    %509 = vrot.lane.b32.xlu0 %v497, 64
    %v510 = vpop.permute.xlu0 %509
    %511 = vrot.lane.b32.xlu0 %v498, 64
    %v512 = vpop.permute.xlu0 %511
    %v515 = vmul.f32 %v490, %v510
    %v516 = vmul.f32 %v494, %v512
    %519 = vrot.lane.b32.xlu0 %v515, 64
    %v520 = vpop.permute.xlu0 %519
    %521 = vrot.lane.b32.xlu0 %v516, 64
    %v522 = vpop.permute.xlu0 %521
    %v525 = vadd.f32 %v505, %v520
    %v526 = vadd.f32 %v506, %v522
    %v527 = vtanh.pop %v525
    %v528 = vtanh.pop %v526
    %531 = vrot.lane.b32.xlu0 %v527, 64
    %v532 = vpop.permute.xlu0 %531
    %533 = vrot.lane.b32.xlu0 %v528, 64
    %v534 = vpop.permute.xlu0 %533
    %v537 = vmul.f32 %v492, %v532
    %v538 = vmul.f32 %v496, %v534
    %v539 = vpack.c.bf16 %v537, %v537
    %v540 = vpack.c.bf16 %v538, %v538
    %v543 = vunpack.c.l.b16 %v539
    %v544 = vunpack.c.l.b16 %v540
    %v545 = vrot.slane %v543, 2
    %v546 = vrot.slane %v544, 1
    %v547 = vsel %vm240, %v546, %v545
    %v548 = vpack.c.b16 %v547, %v547
    %v550 = vsel %vm283, %v548, 0
    %552 = vmatprep.subr.bf16.mxu0 0
    %553 = vmatpush1.bf16.msra.mxu0 0
    %554 = vmatprep.subr.bf16.mxu0 0
    %555 = vmatpush1.bf16.msra.mxu0 0
    %556 = vmatprep.subr.bf16.mxu0 0
    %557 = vmatpush1.bf16.msra.mxu0 0
    %558 = vmatprep.subr.bf16.mxu0 0
    %559 = vmatpush1.bf16.msra.mxu0 0
    %560 = vmatprep.subr.bf16.mxu0 %v274
    %561 = vmatpush1.bf16.msra.mxu0 %v273
    %562 = vmatprep.subr.bf16.mxu0 %v272
    %563 = vmatpush1.bf16.msra.mxu0 %v271
    %564 = vmatprep.subr.bf16.mxu0 %v270
    %565 = vmatpush1.bf16.msra.mxu0 %v269
    %566 = vmatprep.subr.bf16.mxu0 %v268
    %567 = vmatpush1.bf16.msra.mxu0 %v267
    %568 = vmatprep.subr.bf16.mxu0 0
    %569 = vmatpush2.bf16.msra.mxu0 0
    %570 = vmatprep.subr.bf16.mxu0 0
    %571 = vmatpush2.bf16.msra.mxu0 0
    %572 = vmatprep.subr.bf16.mxu0 0
    %573 = vmatpush2.bf16.msra.mxu0 0
    %574 = vmatprep.subr.bf16.mxu0 0
    %575 = vmatpush2.bf16.msra.mxu0 0
    %576 = vmatprep.subr.bf16.mxu0 0
    %577 = vmatpush2.bf16.msra.mxu0 0
    %578 = vmatprep.subr.bf16.mxu0 0
    %579 = vmatpush2.bf16.msra.mxu0 0
    %580 = vmatprep.subr.bf16.mxu0 0
    %581 = vmatpush2.bf16.msra.mxu0 0
    %582 = vmatprep.subr.bf16.mxu0 0
    %583 = vmatpush2.bf16.msra.mxu0 0
    %584 = vmatprep.mubr.bf16.mxu0 0
    %585 = vmatmul.mubr.bf16.gmra.mxu0 %v550
    %v586 = vpop.f32.mrf.mxu0
    %v587 = vadd.f32 0.0, %v586
    %v588 = vpop.f32.mrf.mxu0
    %v589 = vadd.f32 0.0, %v588
    %v590 = vpop.f32.mrf.mxu0
    %v591 = vpop.f32.mrf.mxu0
    %592 = vdwg.mxu0
    %v595 = vrot.slane %v587, 5
    %v596 = vrot.slane %v589, 5
    %v597 = vrot.slane %v587, 6
    %v598 = vrot.slane %v589, 6
    %v603 = vadd.f32 %v169, %v595
    %v604 = vadd.f32 %v170, %v596
    %v605 = vadd.f32 %v171, %v597
    %v606 = vadd.f32 %v172, %v598
    %v607 = vxor.u32 %v603, 2147483648
    %v608 = vxor.u32 %v604, 2147483648
    %v609 = vxor.u32 %v605, 2147483648
    %v610 = vxor.u32 %v606, 2147483648
    %v611 = vmul.f32 %v607, 1.442695
    %v612 = vpow.pop %v611
    %v613 = vmul.f32 %v608, 1.442695
    %v614 = vpow.pop %v613
    %v615 = vmul.f32 %v609, 1.442695
    %v616 = vpow.pop %v615
    %v617 = vmul.f32 %v610, 1.442695
    %v618 = vpow.pop %v617
    %v619 = vadd.f32 %v612, 1.0
    %v620 = vadd.f32 %v614, 1.0
    %v621 = vadd.f32 %v616, 1.0
    %v622 = vadd.f32 %v618, 1.0
    %v623 = vrcp.pop %v619
    %v624 = vmul.f32 1.0, %v623
    %v625 = vrcp.pop %v620
    %v626 = vmul.f32 1.0, %v625
    %v627 = vrcp.pop %v621
    %v628 = vmul.f32 1.0, %v627
    %v629 = vrcp.pop %v622
    %v630 = vmul.f32 1.0, %v629
    %v631 = vtanh.pop %v604
    %v632 = vtanh.pop %v606
    %v635 = vrot.slane %v525, 7
    %v636 = vrot.slane %v526, 7
    %v639 = vmul.f32 %v624, %v635
    %v640 = vmul.f32 %v628, %v636
    %643 = vrot.lane.b32.xlu0 %v631, 64
    %v644 = vpop.permute.xlu0 %643
    %645 = vrot.lane.b32.xlu0 %v632, 64
    %v646 = vpop.permute.xlu0 %645
    %v649 = vmul.f32 %v624, %v644
    %v650 = vmul.f32 %v628, %v646
    %653 = vrot.lane.b32.xlu0 %v649, 64
    %v654 = vpop.permute.xlu0 %653
    %655 = vrot.lane.b32.xlu0 %v650, 64
    %v656 = vpop.permute.xlu0 %655
    %v659 = vadd.f32 %v639, %v654
    %v660 = vadd.f32 %v640, %v656
    %v661 = vtanh.pop %v659
    %v662 = vtanh.pop %v660
    %665 = vrot.lane.b32.xlu0 %v661, 64
    %v666 = vpop.permute.xlu0 %665
    %667 = vrot.lane.b32.xlu0 %v662, 64
    %v668 = vpop.permute.xlu0 %667
    %v671 = vmul.f32 %v626, %v666
    %v672 = vmul.f32 %v630, %v668
    %v673 = vpack.c.bf16 %v671, %v671
    %v674 = vpack.c.bf16 %v672, %v672
    %v677 = vunpack.c.l.b16 %v673
    %v678 = vunpack.c.l.b16 %v674
    %v679 = vrot.slane %v677, 3
    %v680 = vrot.slane %v678, 2
    %v681 = vsel %vm240, %v680, %v679
    %v682 = vpack.c.b16 %v681, %v681
    %v684 = vsel %vm283, %v682, 0
    %686 = vmatprep.subr.bf16.mxu0 0
    %687 = vmatpush1.bf16.msra.mxu0 0
    %688 = vmatprep.subr.bf16.mxu0 0
    %689 = vmatpush1.bf16.msra.mxu0 0
    %690 = vmatprep.subr.bf16.mxu0 0
    %691 = vmatpush1.bf16.msra.mxu0 0
    %692 = vmatprep.subr.bf16.mxu0 0
    %693 = vmatpush1.bf16.msra.mxu0 0
    %694 = vmatprep.subr.bf16.mxu0 %v274
    %695 = vmatpush1.bf16.msra.mxu0 %v273
    %696 = vmatprep.subr.bf16.mxu0 %v272
    %697 = vmatpush1.bf16.msra.mxu0 %v271
    %698 = vmatprep.subr.bf16.mxu0 %v270
    %699 = vmatpush1.bf16.msra.mxu0 %v269
    %700 = vmatprep.subr.bf16.mxu0 %v268
    %701 = vmatpush1.bf16.msra.mxu0 %v267
    %702 = vmatprep.subr.bf16.mxu0 0
    %703 = vmatpush2.bf16.msra.mxu0 0
    %704 = vmatprep.subr.bf16.mxu0 0
    %705 = vmatpush2.bf16.msra.mxu0 0
    %706 = vmatprep.subr.bf16.mxu0 0
    %707 = vmatpush2.bf16.msra.mxu0 0
    %708 = vmatprep.subr.bf16.mxu0 0
    %709 = vmatpush2.bf16.msra.mxu0 0
    %710 = vmatprep.subr.bf16.mxu0 0
    %711 = vmatpush2.bf16.msra.mxu0 0
    %712 = vmatprep.subr.bf16.mxu0 0
    %713 = vmatpush2.bf16.msra.mxu0 0
    %714 = vmatprep.subr.bf16.mxu0 0
    %715 = vmatpush2.bf16.msra.mxu0 0
    %716 = vmatprep.subr.bf16.mxu0 0
    %717 = vmatpush2.bf16.msra.mxu0 0
    %718 = vmatprep.mubr.bf16.mxu0 0
    %719 = vmatmul.mubr.bf16.gmra.mxu0 %v684
    %v720 = vpop.f32.mrf.mxu0
    %v721 = vadd.f32 0.0, %v720
    %v722 = vpop.f32.mrf.mxu0
    %v723 = vadd.f32 0.0, %v722
    %v724 = vpop.f32.mrf.mxu0
    %v725 = vpop.f32.mrf.mxu0
    %726 = vdwg.mxu0
    %v729 = vrot.slane %v721, 4
    %v730 = vrot.slane %v723, 4
    %v731 = vrot.slane %v721, 5
    %v732 = vrot.slane %v723, 5
    %v737 = vadd.f32 %v169, %v729
    %v738 = vadd.f32 %v170, %v730
    %v739 = vadd.f32 %v171, %v731
    %v740 = vadd.f32 %v172, %v732
    %v741 = vxor.u32 %v737, 2147483648
    %v742 = vxor.u32 %v738, 2147483648
    %v743 = vxor.u32 %v739, 2147483648
    %v744 = vxor.u32 %v740, 2147483648
    %v745 = vmul.f32 %v741, 1.442695
    %v746 = vpow.pop %v745
    %v747 = vmul.f32 %v742, 1.442695
    %v748 = vpow.pop %v747
    %v749 = vmul.f32 %v743, 1.442695
    %v750 = vpow.pop %v749
    %v751 = vmul.f32 %v744, 1.442695
    %v752 = vpow.pop %v751
    %v753 = vadd.f32 %v746, 1.0
    %v754 = vadd.f32 %v748, 1.0
    %v755 = vadd.f32 %v750, 1.0
    %v756 = vadd.f32 %v752, 1.0
    %v757 = vrcp.pop %v753
    %v758 = vmul.f32 1.0, %v757
    %v759 = vrcp.pop %v754
    %v760 = vmul.f32 1.0, %v759
    %v761 = vrcp.pop %v755
    %v762 = vmul.f32 1.0, %v761
    %v763 = vrcp.pop %v756
    %v764 = vmul.f32 1.0, %v763
    %v765 = vtanh.pop %v738
    %v766 = vtanh.pop %v740
    %v769 = vrot.slane %v659, 7
    %v770 = vrot.slane %v660, 7
    %v773 = vmul.f32 %v758, %v769
    %v774 = vmul.f32 %v762, %v770
    %777 = vrot.lane.b32.xlu0 %v765, 64
    %v778 = vpop.permute.xlu0 %777
    %779 = vrot.lane.b32.xlu0 %v766, 64
    %v780 = vpop.permute.xlu0 %779
    %v783 = vmul.f32 %v758, %v778
    %v784 = vmul.f32 %v762, %v780
    %787 = vrot.lane.b32.xlu0 %v783, 64
    %v788 = vpop.permute.xlu0 %787
    %789 = vrot.lane.b32.xlu0 %v784, 64
    %v790 = vpop.permute.xlu0 %789
    %v793 = vadd.f32 %v773, %v788
    %v794 = vadd.f32 %v774, %v790
    %v795 = vtanh.pop %v793
    %v796 = vtanh.pop %v794
    %799 = vrot.lane.b32.xlu0 %v795, 64
    %v800 = vpop.permute.xlu0 %799
    %801 = vrot.lane.b32.xlu0 %v796, 64
    %v802 = vpop.permute.xlu0 %801
    %v805 = vmul.f32 %v760, %v800
    %v806 = vmul.f32 %v764, %v802
    %v807 = vpack.c.bf16 %v805, %v805
    %v808 = vpack.c.bf16 %v806, %v806
    %v811 = vunpack.c.l.b16 %v807
    %v812 = vunpack.c.l.b16 %v808
    %v813 = vrot.slane %v811, 4
    %v814 = vrot.slane %v812, 3
    %v815 = vsel %vm240, %v814, %v813
    %v816 = vpack.c.b16 %v815, %v815
    %v818 = vsel %vm283, %v816, 0
    %820 = vmatprep.subr.bf16.mxu0 0
    %821 = vmatpush1.bf16.msra.mxu0 0
    %822 = vmatprep.subr.bf16.mxu0 0
    %823 = vmatpush1.bf16.msra.mxu0 0
    %824 = vmatprep.subr.bf16.mxu0 0
    %825 = vmatpush1.bf16.msra.mxu0 0
    %826 = vmatprep.subr.bf16.mxu0 0
    %827 = vmatpush1.bf16.msra.mxu0 0
    %828 = vmatprep.subr.bf16.mxu0 %v274
    %829 = vmatpush1.bf16.msra.mxu0 %v273
    %830 = vmatprep.subr.bf16.mxu0 %v272
    %831 = vmatpush1.bf16.msra.mxu0 %v271
    %832 = vmatprep.subr.bf16.mxu0 %v270
    %833 = vmatpush1.bf16.msra.mxu0 %v269
    %834 = vmatprep.subr.bf16.mxu0 %v268
    %835 = vmatpush1.bf16.msra.mxu0 %v267
    %836 = vmatprep.subr.bf16.mxu0 0
    %837 = vmatpush2.bf16.msra.mxu0 0
    %838 = vmatprep.subr.bf16.mxu0 0
    %839 = vmatpush2.bf16.msra.mxu0 0
    %840 = vmatprep.subr.bf16.mxu0 0
    %841 = vmatpush2.bf16.msra.mxu0 0
    %842 = vmatprep.subr.bf16.mxu0 0
    %843 = vmatpush2.bf16.msra.mxu0 0
    %844 = vmatprep.subr.bf16.mxu0 0
    %845 = vmatpush2.bf16.msra.mxu0 0
    %846 = vmatprep.subr.bf16.mxu0 0
    %847 = vmatpush2.bf16.msra.mxu0 0
    %848 = vmatprep.subr.bf16.mxu0 0
    %849 = vmatpush2.bf16.msra.mxu0 0
    %850 = vmatprep.subr.bf16.mxu0 0
    %851 = vmatpush2.bf16.msra.mxu0 0
    %852 = vmatprep.mubr.bf16.mxu0 0
    %853 = vmatmul.mubr.bf16.gmra.mxu0 %v818
    %v854 = vpop.f32.mrf.mxu0
    %v855 = vadd.f32 0.0, %v854
    %v856 = vpop.f32.mrf.mxu0
    %v857 = vadd.f32 0.0, %v856
    %v858 = vpop.f32.mrf.mxu0
    %v859 = vpop.f32.mrf.mxu0
    %860 = vdwg.mxu0
    %v863 = vrot.slane %v855, 3
    %v864 = vrot.slane %v857, 3
    %v865 = vrot.slane %v855, 4
    %v866 = vrot.slane %v857, 4
    %v871 = vadd.f32 %v169, %v863
    %v872 = vadd.f32 %v170, %v864
    %v873 = vadd.f32 %v171, %v865
    %v874 = vadd.f32 %v172, %v866
    %v875 = vxor.u32 %v871, 2147483648
    %v876 = vxor.u32 %v872, 2147483648
    %v877 = vxor.u32 %v873, 2147483648
    %v878 = vxor.u32 %v874, 2147483648
    %v879 = vmul.f32 %v875, 1.442695
    %v880 = vpow.pop %v879
    %v881 = vmul.f32 %v876, 1.442695
    %v882 = vpow.pop %v881
    %v883 = vmul.f32 %v877, 1.442695
    %v884 = vpow.pop %v883
    %v885 = vmul.f32 %v878, 1.442695
    %v886 = vpow.pop %v885
    %v887 = vadd.f32 %v880, 1.0
    %v888 = vadd.f32 %v882, 1.0
    %v889 = vadd.f32 %v884, 1.0
    %v890 = vadd.f32 %v886, 1.0
    %v891 = vrcp.pop %v887
    %v892 = vmul.f32 1.0, %v891
    %v893 = vrcp.pop %v888
    %v894 = vmul.f32 1.0, %v893
    %v895 = vrcp.pop %v889
    %v896 = vmul.f32 1.0, %v895
    %v897 = vrcp.pop %v890
    %v898 = vmul.f32 1.0, %v897
    %v899 = vtanh.pop %v872
    %v900 = vtanh.pop %v874
    %v903 = vrot.slane %v793, 7
    %v904 = vrot.slane %v794, 7
    %v907 = vmul.f32 %v892, %v903
    %v908 = vmul.f32 %v896, %v904
    %911 = vrot.lane.b32.xlu0 %v899, 64
    %v912 = vpop.permute.xlu0 %911
    %913 = vrot.lane.b32.xlu0 %v900, 64
    %v914 = vpop.permute.xlu0 %913
    %v917 = vmul.f32 %v892, %v912
    %v918 = vmul.f32 %v896, %v914
    %921 = vrot.lane.b32.xlu0 %v917, 64
    %v922 = vpop.permute.xlu0 %921
    %923 = vrot.lane.b32.xlu0 %v918, 64
    %v924 = vpop.permute.xlu0 %923
    %v927 = vadd.f32 %v907, %v922
    %v928 = vadd.f32 %v908, %v924
    %v929 = vtanh.pop %v927
    %v930 = vtanh.pop %v928
    %933 = vrot.lane.b32.xlu0 %v929, 64
    %v934 = vpop.permute.xlu0 %933
    %935 = vrot.lane.b32.xlu0 %v930, 64
    %v936 = vpop.permute.xlu0 %935
    %v939 = vmul.f32 %v894, %v934
    %v940 = vmul.f32 %v898, %v936
    %v941 = vpack.c.bf16 %v939, %v939
    %v942 = vpack.c.bf16 %v940, %v940
    %v945 = vunpack.c.l.b16 %v941
    %v946 = vunpack.c.l.b16 %v942
    %v947 = vrot.slane %v945, 5
    %v948 = vrot.slane %v946, 4
    %v949 = vsel %vm240, %v948, %v947
    %v950 = vpack.c.b16 %v949, %v949
    %v952 = vsel %vm283, %v950, 0
    %954 = vmatprep.subr.bf16.mxu0 0
    %955 = vmatpush1.bf16.msra.mxu0 0
    %956 = vmatprep.subr.bf16.mxu0 0
    %957 = vmatpush1.bf16.msra.mxu0 0
    %958 = vmatprep.subr.bf16.mxu0 0
    %959 = vmatpush1.bf16.msra.mxu0 0
    %960 = vmatprep.subr.bf16.mxu0 0
    %961 = vmatpush1.bf16.msra.mxu0 0
    %962 = vmatprep.subr.bf16.mxu0 %v274
    %963 = vmatpush1.bf16.msra.mxu0 %v273
    %964 = vmatprep.subr.bf16.mxu0 %v272
    %965 = vmatpush1.bf16.msra.mxu0 %v271
    %966 = vmatprep.subr.bf16.mxu0 %v270
    %967 = vmatpush1.bf16.msra.mxu0 %v269
    %968 = vmatprep.subr.bf16.mxu0 %v268
    %969 = vmatpush1.bf16.msra.mxu0 %v267
    %970 = vmatprep.subr.bf16.mxu0 0
    %971 = vmatpush2.bf16.msra.mxu0 0
    %972 = vmatprep.subr.bf16.mxu0 0
    %973 = vmatpush2.bf16.msra.mxu0 0
    %974 = vmatprep.subr.bf16.mxu0 0
    %975 = vmatpush2.bf16.msra.mxu0 0
    %976 = vmatprep.subr.bf16.mxu0 0
    %977 = vmatpush2.bf16.msra.mxu0 0
    %978 = vmatprep.subr.bf16.mxu0 0
    %979 = vmatpush2.bf16.msra.mxu0 0
    %980 = vmatprep.subr.bf16.mxu0 0
    %981 = vmatpush2.bf16.msra.mxu0 0
    %982 = vmatprep.subr.bf16.mxu0 0
    %983 = vmatpush2.bf16.msra.mxu0 0
    %984 = vmatprep.subr.bf16.mxu0 0
    %985 = vmatpush2.bf16.msra.mxu0 0
    %986 = vmatprep.mubr.bf16.mxu0 0
    %987 = vmatmul.mubr.bf16.gmra.mxu0 %v952
    %v988 = vpop.f32.mrf.mxu0
    %v989 = vadd.f32 0.0, %v988
    %v990 = vpop.f32.mrf.mxu0
    %v991 = vadd.f32 0.0, %v990
    %v992 = vpop.f32.mrf.mxu0
    %v993 = vpop.f32.mrf.mxu0
    %994 = vdwg.mxu0
    %v997 = vrot.slane %v989, 2
    %v998 = vrot.slane %v991, 2
    %v999 = vrot.slane %v989, 3
    %v1000 = vrot.slane %v991, 3
    %v1005 = vadd.f32 %v169, %v997
    %v1006 = vadd.f32 %v170, %v998
    %v1007 = vadd.f32 %v171, %v999
    %v1008 = vadd.f32 %v172, %v1000
    %v1009 = vxor.u32 %v1005, 2147483648
    %v1010 = vxor.u32 %v1006, 2147483648
    %v1011 = vxor.u32 %v1007, 2147483648
    %v1012 = vxor.u32 %v1008, 2147483648
    %v1013 = vmul.f32 %v1009, 1.442695
    %v1014 = vpow.pop %v1013
    %v1015 = vmul.f32 %v1010, 1.442695
    %v1016 = vpow.pop %v1015
    %v1017 = vmul.f32 %v1011, 1.442695
    %v1018 = vpow.pop %v1017
    %v1019 = vmul.f32 %v1012, 1.442695
    %v1020 = vpow.pop %v1019
    %v1021 = vadd.f32 %v1014, 1.0
    %v1022 = vadd.f32 %v1016, 1.0
    %v1023 = vadd.f32 %v1018, 1.0
    %v1024 = vadd.f32 %v1020, 1.0
    %v1025 = vrcp.pop %v1021
    %v1026 = vmul.f32 1.0, %v1025
    %v1027 = vrcp.pop %v1022
    %v1028 = vmul.f32 1.0, %v1027
    %v1029 = vrcp.pop %v1023
    %v1030 = vmul.f32 1.0, %v1029
    %v1031 = vrcp.pop %v1024
    %v1032 = vmul.f32 1.0, %v1031
    %v1033 = vtanh.pop %v1006
    %v1034 = vtanh.pop %v1008
    %v1037 = vrot.slane %v927, 7
    %v1038 = vrot.slane %v928, 7
    %v1041 = vmul.f32 %v1026, %v1037
    %v1042 = vmul.f32 %v1030, %v1038
    %1045 = vrot.lane.b32.xlu0 %v1033, 64
    %v1046 = vpop.permute.xlu0 %1045
    %1047 = vrot.lane.b32.xlu0 %v1034, 64
    %v1048 = vpop.permute.xlu0 %1047
    %v1051 = vmul.f32 %v1026, %v1046
    %v1052 = vmul.f32 %v1030, %v1048
    %1055 = vrot.lane.b32.xlu0 %v1051, 64
    %v1056 = vpop.permute.xlu0 %1055
    %1057 = vrot.lane.b32.xlu0 %v1052, 64
    %v1058 = vpop.permute.xlu0 %1057
    %v1061 = vadd.f32 %v1041, %v1056
    %v1062 = vadd.f32 %v1042, %v1058
    %v1063 = vtanh.pop %v1061
    %v1064 = vtanh.pop %v1062
    %1067 = vrot.lane.b32.xlu0 %v1063, 64
    %v1068 = vpop.permute.xlu0 %1067
    %1069 = vrot.lane.b32.xlu0 %v1064, 64
    %v1070 = vpop.permute.xlu0 %1069
    %v1073 = vmul.f32 %v1028, %v1068
    %v1074 = vmul.f32 %v1032, %v1070
    %v1075 = vpack.c.bf16 %v1073, %v1073
    %v1076 = vpack.c.bf16 %v1074, %v1074
    %v1079 = vunpack.c.l.b16 %v1075
    %v1080 = vunpack.c.l.b16 %v1076
    %v1081 = vrot.slane %v1079, 6
    %v1082 = vrot.slane %v1080, 5
    %v1083 = vsel %vm240, %v1082, %v1081
    %v1084 = vpack.c.b16 %v1083, %v1083
    %v1086 = vsel %vm283, %v1084, 0
    %1088 = vmatprep.subr.bf16.mxu0 0
    %1089 = vmatpush1.bf16.msra.mxu0 0
    %1090 = vmatprep.subr.bf16.mxu0 0
    %1091 = vmatpush1.bf16.msra.mxu0 0
    %1092 = vmatprep.subr.bf16.mxu0 0
    %1093 = vmatpush1.bf16.msra.mxu0 0
    %1094 = vmatprep.subr.bf16.mxu0 0
    %1095 = vmatpush1.bf16.msra.mxu0 0
    %1096 = vmatprep.subr.bf16.mxu0 %v274
    %1097 = vmatpush1.bf16.msra.mxu0 %v273
    %1098 = vmatprep.subr.bf16.mxu0 %v272
    %1099 = vmatpush1.bf16.msra.mxu0 %v271
    %1100 = vmatprep.subr.bf16.mxu0 %v270
    %1101 = vmatpush1.bf16.msra.mxu0 %v269
    %1102 = vmatprep.subr.bf16.mxu0 %v268
    %1103 = vmatpush1.bf16.msra.mxu0 %v267
    %1104 = vmatprep.subr.bf16.mxu0 0
    %1105 = vmatpush2.bf16.msra.mxu0 0
    %1106 = vmatprep.subr.bf16.mxu0 0
    %1107 = vmatpush2.bf16.msra.mxu0 0
    %1108 = vmatprep.subr.bf16.mxu0 0
    %1109 = vmatpush2.bf16.msra.mxu0 0
    %1110 = vmatprep.subr.bf16.mxu0 0
    %1111 = vmatpush2.bf16.msra.mxu0 0
    %1112 = vmatprep.subr.bf16.mxu0 0
    %1113 = vmatpush2.bf16.msra.mxu0 0
    %1114 = vmatprep.subr.bf16.mxu0 0
    %1115 = vmatpush2.bf16.msra.mxu0 0
    %1116 = vmatprep.subr.bf16.mxu0 0
    %1117 = vmatpush2.bf16.msra.mxu0 0
    %1118 = vmatprep.subr.bf16.mxu0 0
    %1119 = vmatpush2.bf16.msra.mxu0 0
    %1120 = vmatprep.mubr.bf16.mxu0 0
    %1121 = vmatmul.mubr.bf16.gmra.mxu0 %v1086
    %v1122 = vpop.f32.mrf.mxu0
    %v1123 = vadd.f32 0.0, %v1122
    %v1124 = vpop.f32.mrf.mxu0
    %v1125 = vadd.f32 0.0, %v1124
    %v1126 = vpop.f32.mrf.mxu0
    %v1127 = vpop.f32.mrf.mxu0
    %1128 = vdwg.mxu0
    %v1131 = vrot.slane %v1123, 1
    %v1132 = vrot.slane %v1125, 1
    %v1133 = vrot.slane %v1123, 2
    %v1134 = vrot.slane %v1125, 2
    %v1139 = vadd.f32 %v169, %v1131
    %v1140 = vadd.f32 %v170, %v1132
    %v1141 = vadd.f32 %v171, %v1133
    %v1142 = vadd.f32 %v172, %v1134
    %v1143 = vxor.u32 %v1139, 2147483648
    %v1144 = vxor.u32 %v1140, 2147483648
    %v1145 = vxor.u32 %v1141, 2147483648
    %v1146 = vxor.u32 %v1142, 2147483648
    %v1147 = vmul.f32 %v1143, 1.442695
    %v1148 = vpow.pop %v1147
    %v1149 = vmul.f32 %v1144, 1.442695
    %v1150 = vpow.pop %v1149
    %v1151 = vmul.f32 %v1145, 1.442695
    %v1152 = vpow.pop %v1151
    %v1153 = vmul.f32 %v1146, 1.442695
    %v1154 = vpow.pop %v1153
    %v1155 = vadd.f32 %v1148, 1.0
    %v1156 = vadd.f32 %v1150, 1.0
    %v1157 = vadd.f32 %v1152, 1.0
    %v1158 = vadd.f32 %v1154, 1.0
    %v1159 = vrcp.pop %v1155
    %v1160 = vmul.f32 1.0, %v1159
    %v1161 = vrcp.pop %v1156
    %v1162 = vmul.f32 1.0, %v1161
    %v1163 = vrcp.pop %v1157
    %v1164 = vmul.f32 1.0, %v1163
    %v1165 = vrcp.pop %v1158
    %v1166 = vmul.f32 1.0, %v1165
    %v1167 = vtanh.pop %v1140
    %v1168 = vtanh.pop %v1142
    %v1171 = vrot.slane %v1061, 7
    %v1172 = vrot.slane %v1062, 7
    %v1175 = vmul.f32 %v1160, %v1171
    %v1176 = vmul.f32 %v1164, %v1172
    %1179 = vrot.lane.b32.xlu0 %v1167, 64
    %v1180 = vpop.permute.xlu0 %1179
    %1181 = vrot.lane.b32.xlu0 %v1168, 64
    %v1182 = vpop.permute.xlu0 %1181
    %v1185 = vmul.f32 %v1160, %v1180
    %v1186 = vmul.f32 %v1164, %v1182
    %1189 = vrot.lane.b32.xlu0 %v1185, 64
    %v1190 = vpop.permute.xlu0 %1189
    %1191 = vrot.lane.b32.xlu0 %v1186, 64
    %v1192 = vpop.permute.xlu0 %1191
    %v1195 = vadd.f32 %v1175, %v1190
    %v1196 = vadd.f32 %v1176, %v1192
    %v1197 = vtanh.pop %v1195
    %v1198 = vtanh.pop %v1196
    %1201 = vrot.lane.b32.xlu0 %v1197, 64
    %v1202 = vpop.permute.xlu0 %1201
    %1203 = vrot.lane.b32.xlu0 %v1198, 64
    %v1204 = vpop.permute.xlu0 %1203
    %v1207 = vmul.f32 %v1162, %v1202
    %v1208 = vmul.f32 %v1166, %v1204
    %s1209 = smul.u32 4, 8
    %s1210 = smul.u32 %s1209, 1
    %s1211 = sshll.u32 %s1210, 4
    %1212 = dma.done [#allocation4], %s1211
    %s1213 = smul.u32 1, 1
    %s1214 = sshll.u32 %s1213, 4
    %1215 = dma.done %s45, %s1214
    %v1216 = vpack.c.bf16 %v1207, %v1207
    %v1217 = vpack.c.bf16 %v1208, %v1208
    %v1218 = vld [vmem:[#allocation2] sm:$0xf]
    %v1219 = vld [vmem:[#allocation2 + $0x4] sm:$0xf]
    %v1220 = vld [vmem:[#allocation2 + $0x8] sm:$0xf]
    %v1221 = vld [vmem:[#allocation2 + $0xc] sm:$0xf]
    %v1222 = vld [vmem:[#allocation2 + $0x10] sm:$0xf]
    %v1223 = vld [vmem:[#allocation2 + $0x14] sm:$0xf]
    %v1224 = vld [vmem:[#allocation2 + $0x18] sm:$0xf]
    %v1225 = vld [vmem:[#allocation2 + $0x1c] sm:$0xf]
    %v1226 = vld [vmem:[#allocation3] sm:$0x1]
    %v1228 = vlaneseq
    %v1229 = vshrl.u32 %v1228, 7
    %v1230 = vsub.s32 0, %v1229
    %v1231 = vrot.slane %v1226, %v1230
    %v1235 = vunpack.c.l.b16 %v1216
    %v1236 = vunpack.c.l.b16 %v1217
    %v1237 = vrot.slane %v1235, 7
    %v1238 = vrot.slane %v1236, 6
    %v1239 = vsel %vm240, %v1238, %v1237
    %v1240 = vpack.c.b16 %v1239, %v1239
    %v1249 = vunpack.c.l.b16 %v1218
    %v1250 = vunpack.c.l.b16 %v1219
    %v1251 = vunpack.c.l.b16 %v1220
    %v1252 = vunpack.c.l.b16 %v1221
    %v1253 = vunpack.c.l.b16 %v1222
    %v1254 = vunpack.c.l.b16 %v1223
    %v1255 = vunpack.c.l.b16 %v1224
    %v1256 = vunpack.c.l.b16 %v1225
    %v1257 = vpack.c.b16 %v1250, %v1249
    %v1258 = vpack.c.b16 %v1252, %v1251
    %v1259 = vpack.c.b16 %v1254, %v1253
    %v1260 = vpack.c.b16 %v1256, %v1255
    %v1266 = vsel %vm283, %v1240, 0
    %1268 = vmatprep.subr.bf16.mxu0 0
    %1269 = vmatpush1.bf16.msra.mxu0 0
    %1270 = vmatprep.subr.bf16.mxu0 0
    %1271 = vmatpush1.bf16.msra.mxu0 0
    %1272 = vmatprep.subr.bf16.mxu0 0
    %1273 = vmatpush1.bf16.msra.mxu0 0
    %1274 = vmatprep.subr.bf16.mxu0 0
    %1275 = vmatpush1.bf16.msra.mxu0 0
    %1276 = vmatprep.subr.bf16.mxu0 0
    %1277 = vmatpush1.bf16.msra.mxu0 %v1260
    %1278 = vmatprep.subr.bf16.mxu0 0
    %1279 = vmatpush1.bf16.msra.mxu0 %v1259
    %1280 = vmatprep.subr.bf16.mxu0 0
    %1281 = vmatpush1.bf16.msra.mxu0 %v1258
    %1282 = vmatprep.subr.bf16.mxu0 0
    %1283 = vmatpush1.bf16.msra.mxu0 %v1257
    %1284 = vmatprep.subr.bf16.mxu0 0
    %1285 = vmatpush2.bf16.msra.mxu0 0
    %1286 = vmatprep.subr.bf16.mxu0 0
    %1287 = vmatpush2.bf16.msra.mxu0 0
    %1288 = vmatprep.subr.bf16.mxu0 0
    %1289 = vmatpush2.bf16.msra.mxu0 0
    %1290 = vmatprep.subr.bf16.mxu0 0
    %1291 = vmatpush2.bf16.msra.mxu0 0
    %1292 = vmatprep.subr.bf16.mxu0 0
    %1293 = vmatpush2.bf16.msra.mxu0 0
    %1294 = vmatprep.subr.bf16.mxu0 0
    %1295 = vmatpush2.bf16.msra.mxu0 0
    %1296 = vmatprep.subr.bf16.mxu0 0
    %1297 = vmatpush2.bf16.msra.mxu0 0
    %1298 = vmatprep.subr.bf16.mxu0 0
    %1299 = vmatpush2.bf16.msra.mxu0 0
    %1300 = vmatprep.mubr.bf16.mxu0 0
    %1301 = vmatmul.mubr.bf16.gmra.mxu0 %v1266
    %v1302 = vpop.f32.mrf.mxu0
    %v1303 = vadd.f32 %v1231, %v1302
    %v1304 = vpop.f32.mrf.mxu0
    %v1305 = vpop.f32.mrf.mxu0
    %v1306 = vpop.f32.mrf.mxu0
    %1307 = vdwg.mxu0
    %1308 = vst [vmem:[%s6] sm:$0x3] %v1303
    // Predicated region
    $region56: #{controller_forward.1} parent=1 // pred_check
      _
    $region57: #{controller_forward.1} parent=1 // pred_check_branch
      %1310 = sbr.rel (0) target = $region59
    $region58: #{controller_forward.1} parent=1 // pred_region
      _
    $region59: #{controller_forward.1} parent=1 // pred_fallthru
      _
    // Predicated region
    $region60: #{controller_forward.1} parent=1 // pred_check
      _
    $region61: #{controller_forward.1} parent=1 // pred_check_branch
      %1312 = sbr.rel (0) target = $region63
    $region62: #{controller_forward.1} parent=1 // pred_region
      _
    $region63: #{controller_forward.1} parent=1 // pred_fallthru
      _
    %1313 = vsyncpa [#allocation6], 1
  %1314 = vsyncmov [#allocation4]
  %s1315 = vpop.sfrf %1314
  %p1316 = scmp.eq.s32.totalorder %s1315, 0
  %p1317 = pneg %p1316
  %1319 = shalt.err (%p1317)
  %s1320 = scalar_lea.sflag [#allocation4], 1
  %1321 = vsyncmov %s1320
  %s1322 = vpop.sfrf %1321
  %p1323 = scmp.eq.s32.totalorder %s1322, 0
  %p1324 = pneg %p1323
  %1326 = shalt.err (%p1324)

</llo_original>
